<compile_context>
chip_gen: v5e
topology: v5e:2x2
jax: 0.10.0
libtpu: 0.0.40
codegen_flags: <defaults>
</compile_context>

<pallas_src>
import jax
import jax.numpy as jnp
from jax.experimental import pallas as pl
from jax.experimental.pallas import tpu as pltpu

EPS = 1e-5          # InstanceNorm1d default eps
NEG_SLOPE = 0.01    # LeakyReLU default negative_slope


# --------------------------------------------------------------------------
# Fused kernel: attention + residual -> InstanceNorm -> FFN + residual -> InstanceNorm
# One grid step processes Nb batch elements (block = (Nb, L, E)).
# --------------------------------------------------------------------------
def _make_cab_kernel(nhead, has_pos):
    def kernel(*refs):
        if has_pos:
            src_ref, pos_ref = refs[0], refs[1]
            rest = refs[2:]
        else:
            src_ref, pos_ref = refs[0], None
            rest = refs[1:]
        (wqk_ref, bqk_ref, wv_ref, bv_ref, wo_ref, bo_ref,
         n1g_ref, n1b_ref, w1_ref, b1_ref, w2_ref, b2_ref,
         n2g_ref, n2b_ref, out_ref) = rest

        Nb, L, E = src_ref.shape
        Dh = E // nhead
        scale = 1.0 / float(Dh) ** 0.5
        cdt = wqk_ref.dtype                      # MXU-input dtype (bf16 by default)

        # Weights / biases (loaded once per grid step; block index never changes).
        wqk = wqk_ref[...]                       # (E, 2E)  [Wq | Wk], pre-transposed
        wv_w = wv_ref[...]                       # (E, E)
        w1 = w1_ref[...]                         # (E, F)
        w2 = w2_ref[...]                         # (F, E)
        bqk = bqk_ref[...]                       # (1, 2E) f32
        bv = bv_ref[...]                         # (1, E)
        bo = bo_ref[...]                         # (1, E)
        b1 = b1_ref[...]                         # (1, F)
        b2 = b2_ref[...]                         # (1, E)
        n1g, n1b = n1g_ref[...], n1b_ref[...]    # (1, E)
        n2g, n2b = n2g_ref[...], n2b_ref[...]    # (1, E)

        def inorm(x, g, b):
            # InstanceNorm1d: normalize over the sequence dim, per channel.
            m = jnp.mean(x, axis=0, keepdims=True)
            v = jnp.mean((x - m) ** 2, axis=0, keepdims=True)    # biased variance
            return (x - m) * jax.lax.rsqrt(v + EPS) * g + b

        for b in range(Nb):                                      # static unroll
            src = src_ref[b]                                     # (L, E) f32
            qin = src + pos_ref[b] if has_pos else src           # q = k = src + pos

            # Fused Q/K projection, separate V projection (value uses src, not qin).
            qk = jnp.dot(qin.astype(cdt), wqk,
                         preferred_element_type=jnp.float32) + bqk   # (L, 2E)
            v = jnp.dot(src.astype(cdt), wv_w,
                        preferred_element_type=jnp.float32) + bv     # (L, E)

            # Per-head attention; output projection folded into the head loop so
            # per-head contexts accumulate directly into a lane-dense (L, E) buffer.
            attn = jnp.zeros((L, E), jnp.float32)
            for h in range(nhead):                               # static unroll
                lo = h * Dh
                qh = (qk[:, lo:lo + Dh] * scale).astype(cdt)     # (L, Dh)
                kh = qk[:, E + lo:E + lo + Dh].astype(cdt)       # (L, Dh)
                vh = v[:, lo:lo + Dh].astype(cdt)                # (L, Dh)
                # scores = qh @ kh^T via dot_general (no materialized transpose)
                s = jax.lax.dot_general(
                    qh, kh, (((1,), (1,)), ((), ())),
                    preferred_element_type=jnp.float32)          # (L, L) f32
                s = s - jnp.max(s, axis=-1, keepdims=True)
                p = jnp.exp(s)
                p = p * pl.reciprocal(jnp.sum(p, axis=-1, keepdims=True),
                                      approx=True)
                ctx = jnp.dot(p.astype(cdt), vh,
                              preferred_element_type=jnp.float32)    # (L, Dh)
                attn = attn + jnp.dot(ctx.astype(cdt), wo_ref[h],
                                      preferred_element_type=jnp.float32)

            x = src + attn + bo                                  # residual add
            x = inorm(x, n1g, n1b)                               # norm1

            hdn = jnp.dot(x.astype(cdt), w1,
                          preferred_element_type=jnp.float32) + b1
            hdn = jnp.where(hdn > 0, hdn, NEG_SLOPE * hdn)       # LeakyReLU (f32)
            x = x + jnp.dot(hdn.astype(cdt), w2,
                            preferred_element_type=jnp.float32) + b2
            x = inorm(x, n2g, n2b)                               # norm2

            out_ref[b] = x
    return kernel


# --------------------------------------------------------------------------
# pallas_call wrapper
# --------------------------------------------------------------------------
def cab_pallas_fused(src_nle, pos_nle, kp, nhead, batch_block=1):
    """src_nle / pos_nle: (N, L, E) float32.  Returns (N, L, E) float32."""
    N, L, E = src_nle.shape
    Nb = batch_block if (batch_block > 0 and N % batch_block == 0) else 1
    has_pos = pos_nle is not None

    act_spec = pl.BlockSpec((Nb, L, E), lambda i: (i, 0, 0))

    def full_spec(a):
        return pl.BlockSpec(a.shape, lambda i, nd=a.ndim: (0,) * nd)

    weights = [kp["wqk"], kp["bqk"], kp["wv"], kp["bv"], kp["wo"], kp["bo"],
               kp["n1g"], kp["n1b"], kp["w1"], kp["b1"], kp["w2"], kp["b2"],
               kp["n2g"], kp["n2b"]]

    inputs = [src_nle] + ([pos_nle] if has_pos else []) + weights
    in_specs = ([act_spec] + ([act_spec] if has_pos else [])
                + [full_spec(w) for w in weights])

    return pl.pallas_call(
        _make_cab_kernel(nhead, has_pos),
        out_shape=jax.ShapeDtypeStruct((N, L, E), jnp.float32),
        grid=(N // Nb,),
        in_specs=in_specs,
        out_specs=act_spec,
        compiler_params=pltpu.CompilerParams(dimension_semantics=("parallel",)),
    )(*inputs)


def prepare_kernel_params(params, nhead, compute_dtype=jnp.bfloat16):
    """Host-side weight prep: transpose, fuse [Wq|Wk], split Wo per head, cast to bf16."""
    in_w = params["in_proj_w"]                  # (3E, E), PyTorch (out, in) layout
    E = in_w.shape[1]
    assert E % nhead == 0, "d_model must be divisible by nhead"
    Dh = E // nhead
    wq, wk, wv = jnp.split(in_w, 3, axis=0)
    bq, bk, bv = jnp.split(params["in_proj_b"], 3)
    r = lambda x: jnp.asarray(x, jnp.float32).reshape(1, -1)
    return {
        "wqk": jnp.concatenate([wq.T, wk.T], axis=1).astype(compute_dtype),  # (E, 2E)
        "bqk": jnp.concatenate([bq, bk]).reshape(1, -1).astype(jnp.float32),
        "wv": wv.T.astype(compute_dtype),                                    # (E, E)
        "bv": r(bv),
        "wo": params["out_proj_w"].T.reshape(nhead, Dh, E).astype(compute_dtype),
        "bo": r(params["out_proj_b"]),
        "n1g": r(params["norm1_g"]), "n1b": r(params["norm1_b"]),
        "w1": params["lin1_w"].T.astype(compute_dtype),                      # (E, F)
        "b1": r(params["lin1_b"]),
        "w2": params["lin2_w"].T.astype(compute_dtype),                      # (F, E)
        "b2": r(params["lin2_b"]),
        "n2g": r(params["norm2_g"]), "n2b": r(params["norm2_b"]),
    }


def cab_forward(src_lne, params, nhead, pos=None, batch_block=1,
                compute_dtype=jnp.bfloat16):
    """src_lne: (L, N, E) float32 (PyTorch seq-first convention). Returns (L, N, E)."""
    kp = prepare_kernel_params(params, nhead, compute_dtype)
    src_nle = jnp.transpose(src_lne, (1, 0, 2)).astype(jnp.float32)
    pos_nle = None if pos is None else jnp.transpose(pos, (1, 0, 2)).astype(jnp.float32)
    out_nle = cab_pallas_fused(src_nle, pos_nle, kp, nhead, batch_block)
    return jnp.transpose(out_nle, (1, 0, 2))


# --------------------------------------------------------------------------
# Pure-JAX f32 reference (same math as the PyTorch module) for validation
# --------------------------------------------------------------------------
def reference_forward(src_lne, p, nhead, pos=None):
    src = jnp.transpose(src_lne, (1, 0, 2)).astype(jnp.float32)
    qin = src if pos is None else src + jnp.transpose(pos, (1, 0, 2))
    N, L, E = src.shape
    Dh = E // nhead
    scale = 1.0 / (Dh ** 0.5)
    wq, wk, wv = jnp.split(p["in_proj_w"], 3, axis=0)
    bq, bk, bv = jnp.split(p["in_proj_b"], 3)
    Q = (qin @ wq.T + bq).reshape(N, L, nhead, Dh) * scale
    K = (qin @ wk.T + bk).reshape(N, L, nhead, Dh)
    V = (src @ wv.T + bv).reshape(N, L, nhead, Dh)
    s = jnp.einsum("nlhd,nmhd->nhlm", Q, K)
    a = jax.nn.softmax(s, axis=-1)
    o = jnp.einsum("nhlm,nmhd->nlhd", a, V).reshape(N, L, E)
    o = o @ p["out_proj_w"].T + p["out_proj_b"]
    x = src + o

    def inorm(x, g, b):
        m = x.mean(axis=1, keepdims=True)
        v = ((x - m) ** 2).mean(axis=1, keepdims=True)
        return (x - m) / jnp.sqrt(v + EPS) * g + b

    x = inorm(x, p["norm1_g"], p["norm1_b"])
    h = x @ p["lin1_w"].T + p["lin1_b"]
    h = jnp.where(h > 0, h, NEG_SLOPE * h)
    x = x + (h @ p["lin2_w"].T + p["lin2_b"])
    x = inorm(x, p["norm2_g"], p["norm2_b"])
    return jnp.transpose(x, (1, 0, 2))


# --------------------------------------------------------------------------
def init_params(key, d_model, dim_feedforward):
    ks = jax.random.split(key, 8)
    s = 0.1
    return {
        "in_proj_w": jax.random.normal(ks[0], (3 * d_model, d_model), jnp.float32) * s,
        "in_proj_b": jax.random.normal(ks[1], (3 * d_model,), jnp.float32) * s,
        "out_proj_w": jax.random.normal(ks[2], (d_model, d_model), jnp.float32) * s,
        "out_proj_b": jax.random.normal(ks[3], (d_model,), jnp.float32) * s,
        "lin1_w": jax.random.normal(ks[4], (dim_feedforward, d_model), jnp.float32) * s,
        "lin1_b": jax.random.normal(ks[5], (dim_feedforward,), jnp.float32) * s,
        "lin2_w": jax.random.normal(ks[6], (d_model, dim_feedforward), jnp.float32) * s,
        "lin2_b": jax.random.normal(ks[7], (d_model,), jnp.float32) * s,
        # InstanceNorm1d(affine=True) initializes weight=1, bias=0
        "norm1_g": jnp.ones((d_model,), jnp.float32),
        "norm1_b": jnp.zeros((d_model,), jnp.float32),
        "norm2_g": jnp.ones((d_model,), jnp.float32),
        "norm2_b": jnp.zeros((d_model,), jnp.float32),
    }


if __name__ == "__main__":
    L, N, E = 8, 4, 32          # seq, batch, d_model
    NHEAD = 4
    FF = 64                     # dim_feedforward (small for the demo)

    key = jax.random.PRNGKey(0)
    k_src, k_pos, k_par = jax.random.split(key, 3)
    src = jax.random.normal(k_src, (L, N, E), jnp.float32)
    pos = jax.random.normal(k_pos, (L, N, E), jnp.float32)
    params = init_params(k_par, E, FF)

    out = cab_forward(src, params, NHEAD, pos=pos, batch_block=2)
    out = jax.block_until_ready(out)

    ref = reference_forward(src, params, NHEAD, pos=pos)
    assert out.shape == (L, N, E)
    # bf16 MXU inputs + approx softmax reciprocal vs. pure-f32 reference.
    assert jnp.allclose(out, ref, atol=5e-2, rtol=5e-2), "mismatch vs reference"

    print("KERNEL_OK")
</pallas_src>

<mosaic_0001>
module attributes {stable_mosaic.version = 11 : i64} {
  func.func @kernel(%arg0: i32, %arg1: memref<2x8x32xf32, #tpu.memory_space<vmem>>, %arg2: memref<2x8x32xf32, #tpu.memory_space<vmem>>, %arg3: memref<32x64xbf16, #tpu.memory_space<vmem>>, %arg4: memref<1x64xf32, #tpu.memory_space<vmem>>, %arg5: memref<32x32xbf16, #tpu.memory_space<vmem>>, %arg6: memref<1x32xf32, #tpu.memory_space<vmem>>, %arg7: memref<4x8x32xbf16, #tpu.memory_space<vmem>>, %arg8: memref<1x32xf32, #tpu.memory_space<vmem>>, %arg9: memref<1x32xf32, #tpu.memory_space<vmem>>, %arg10: memref<1x32xf32, #tpu.memory_space<vmem>>, %arg11: memref<32x64xbf16, #tpu.memory_space<vmem>>, %arg12: memref<1x64xf32, #tpu.memory_space<vmem>>, %arg13: memref<64x32xbf16, #tpu.memory_space<vmem>>, %arg14: memref<1x32xf32, #tpu.memory_space<vmem>>, %arg15: memref<1x32xf32, #tpu.memory_space<vmem>>, %arg16: memref<1x32xf32, #tpu.memory_space<vmem>>, %arg17: memref<2x8x32xf32, #tpu.memory_space<vmem>>) attributes {dimension_semantics = [#tpu.dimension_semantics<parallel>], iteration_bounds = array<i64: 2>, scalar_prefetch = 0 : i64, scratch_operands = 0 : i64, tpu.core_type = #tpu.core_type<tc>, window_params = [{transform_indices = @transform_0, window_bounds = array<i64: 2, 8, 32>}, {transform_indices = @transform_1, window_bounds = array<i64: 2, 8, 32>}, {pipeline_mode = #tpu.pipeline_mode<synchronous>, transform_indices = @transform_2, window_bounds = array<i64: 32, 64>}, {pipeline_mode = #tpu.pipeline_mode<synchronous>, transform_indices = @transform_3, window_bounds = array<i64: 1, 64>}, {pipeline_mode = #tpu.pipeline_mode<synchronous>, transform_indices = @transform_4, window_bounds = array<i64: 32, 32>}, {pipeline_mode = #tpu.pipeline_mode<synchronous>, transform_indices = @transform_5, window_bounds = array<i64: 1, 32>}, {pipeline_mode = #tpu.pipeline_mode<synchronous>, transform_indices = @transform_6, window_bounds = array<i64: 4, 8, 32>}, {pipeline_mode = #tpu.pipeline_mode<synchronous>, transform_indices = @transform_7, window_bounds = array<i64: 1, 32>}, {pipeline_mode = #tpu.pipeline_mode<synchronous>, transform_indices = @transform_8, window_bounds = array<i64: 1, 32>}, {pipeline_mode = #tpu.pipeline_mode<synchronous>, transform_indices = @transform_9, window_bounds = array<i64: 1, 32>}, {pipeline_mode = #tpu.pipeline_mode<synchronous>, transform_indices = @transform_10, window_bounds = array<i64: 32, 64>}, {pipeline_mode = #tpu.pipeline_mode<synchronous>, transform_indices = @transform_11, window_bounds = array<i64: 1, 64>}, {pipeline_mode = #tpu.pipeline_mode<synchronous>, transform_indices = @transform_12, window_bounds = array<i64: 64, 32>}, {pipeline_mode = #tpu.pipeline_mode<synchronous>, transform_indices = @transform_13, window_bounds = array<i64: 1, 32>}, {pipeline_mode = #tpu.pipeline_mode<synchronous>, transform_indices = @transform_14, window_bounds = array<i64: 1, 32>}, {pipeline_mode = #tpu.pipeline_mode<synchronous>, transform_indices = @transform_15, window_bounds = array<i64: 1, 32>}, {transform_indices = @transform_16, window_bounds = array<i64: 2, 8, 32>}]} {
    %c0 = arith.constant 0 : index
    %c0_0 = arith.constant 0 : index
    %0 = vector.load %arg3[%c0, %c0_0] : memref<32x64xbf16, #tpu.memory_space<vmem>>, vector<32x64xbf16>
    %c0_1 = arith.constant 0 : index
    %c0_2 = arith.constant 0 : index
    %1 = vector.load %arg5[%c0_1, %c0_2] : memref<32x32xbf16, #tpu.memory_space<vmem>>, vector<32x32xbf16>
    %c0_3 = arith.constant 0 : index
    %c0_4 = arith.constant 0 : index
    %2 = vector.load %arg11[%c0_3, %c0_4] : memref<32x64xbf16, #tpu.memory_space<vmem>>, vector<32x64xbf16>
    %c0_5 = arith.constant 0 : index
    %c0_6 = arith.constant 0 : index
    %3 = vector.load %arg13[%c0_5, %c0_6] : memref<64x32xbf16, #tpu.memory_space<vmem>>, vector<64x32xbf16>
    %c0_7 = arith.constant 0 : index
    %c0_8 = arith.constant 0 : index
    %4 = vector.load %arg4[%c0_7, %c0_8] : memref<1x64xf32, #tpu.memory_space<vmem>>, vector<1x64xf32>
    %c0_9 = arith.constant 0 : index
    %c0_10 = arith.constant 0 : index
    %5 = vector.load %arg6[%c0_9, %c0_10] : memref<1x32xf32, #tpu.memory_space<vmem>>, vector<1x32xf32>
    %c0_11 = arith.constant 0 : index
    %c0_12 = arith.constant 0 : index
    %6 = vector.load %arg8[%c0_11, %c0_12] : memref<1x32xf32, #tpu.memory_space<vmem>>, vector<1x32xf32>
    %c0_13 = arith.constant 0 : index
    %c0_14 = arith.constant 0 : index
    %7 = vector.load %arg12[%c0_13, %c0_14] : memref<1x64xf32, #tpu.memory_space<vmem>>, vector<1x64xf32>
    %c0_15 = arith.constant 0 : index
    %c0_16 = arith.constant 0 : index
    %8 = vector.load %arg14[%c0_15, %c0_16] : memref<1x32xf32, #tpu.memory_space<vmem>>, vector<1x32xf32>
    %c0_17 = arith.constant 0 : index
    %c0_18 = arith.constant 0 : index
    %9 = vector.load %arg9[%c0_17, %c0_18] : memref<1x32xf32, #tpu.memory_space<vmem>>, vector<1x32xf32>
    %c0_19 = arith.constant 0 : index
    %c0_20 = arith.constant 0 : index
    %10 = vector.load %arg10[%c0_19, %c0_20] : memref<1x32xf32, #tpu.memory_space<vmem>>, vector<1x32xf32>
    %c0_21 = arith.constant 0 : index
    %c0_22 = arith.constant 0 : index
    %11 = vector.load %arg15[%c0_21, %c0_22] : memref<1x32xf32, #tpu.memory_space<vmem>>, vector<1x32xf32>
    %c0_23 = arith.constant 0 : index
    %c0_24 = arith.constant 0 : index
    %12 = vector.load %arg16[%c0_23, %c0_24] : memref<1x32xf32, #tpu.memory_space<vmem>>, vector<1x32xf32>
    %c0_25 = arith.constant 0 : index
    %c0_26 = arith.constant 0 : index
    %c0_27 = arith.constant 0 : index
    %13 = vector.load %arg1[%c0_25, %c0_26, %c0_27] : memref<2x8x32xf32, #tpu.memory_space<vmem>>, vector<1x8x32xf32>
    %14 = vector.shape_cast %13 : vector<1x8x32xf32> to vector<8x32xf32>
    %c0_28 = arith.constant 0 : index
    %c0_29 = arith.constant 0 : index
    %c0_30 = arith.constant 0 : index
    %15 = vector.load %arg2[%c0_28, %c0_29, %c0_30] : memref<2x8x32xf32, #tpu.memory_space<vmem>>, vector<1x8x32xf32>
    %16 = vector.shape_cast %15 : vector<1x8x32xf32> to vector<8x32xf32>
    %17 = arith.addf %14, %16 : vector<8x32xf32>
    %18 = arith.truncf %17 : vector<8x32xf32> to vector<8x32xbf16>
    %cst = arith.constant dense<0.000000e+00> : vector<8x64xf32>
    %19 = tpu.matmul %18, %0, %cst {dimension_numbers = #tpu.dot_dimension_numbers<[1], [0], [0], [1], [0, 0, 1, 1], [], []>} : vector<8x32xbf16>, vector<32x64xbf16>, vector<8x64xf32> -> vector<8x64xf32>
    %20 = vector.broadcast %4 : vector<1x64xf32> to vector<8x64xf32>
    %21 = arith.addf %19, %20 : vector<8x64xf32>
    %22 = arith.truncf %14 : vector<8x32xf32> to vector<8x32xbf16>
    %cst_31 = arith.constant dense<0.000000e+00> : vector<8x32xf32>
    %23 = tpu.matmul %22, %1, %cst_31 {dimension_numbers = #tpu.dot_dimension_numbers<[1], [0], [0], [1], [0, 0, 1, 1], [], []>} : vector<8x32xbf16>, vector<32x32xbf16>, vector<8x32xf32> -> vector<8x32xf32>
    %24 = vector.broadcast %5 : vector<1x32xf32> to vector<8x32xf32>
    %25 = arith.addf %23, %24 : vector<8x32xf32>
    %cst_32 = arith.constant 0.000000e+00 : f32
    %26 = vector.broadcast %cst_32 : f32 to vector<8x32xf32>
    %27 = vector.extract_strided_slice %21 {offsets = [0, 0], sizes = [8, 8], strides = [1, 1]} : vector<8x64xf32> to vector<8x8xf32>
    %cst_33 = arith.constant 0.353553385 : f32
    %28 = vector.broadcast %cst_33 : f32 to vector<8x8xf32>
    %29 = arith.mulf %27, %28 : vector<8x8xf32>
    %30 = arith.truncf %29 : vector<8x8xf32> to vector<8x8xbf16>
    %31 = vector.extract_strided_slice %21 {offsets = [0, 32], sizes = [8, 8], strides = [1, 1]} : vector<8x64xf32> to vector<8x8xf32>
    %32 = arith.truncf %31 : vector<8x8xf32> to vector<8x8xbf16>
    %33 = vector.extract_strided_slice %25 {offsets = [0, 0], sizes = [8, 8], strides = [1, 1]} : vector<8x32xf32> to vector<8x8xf32>
    %34 = arith.truncf %33 : vector<8x8xf32> to vector<8x8xbf16>
    %cst_34 = arith.constant dense<0.000000e+00> : vector<8x8xf32>
    %35 = tpu.matmul %30, %32, %cst_34 {dimension_numbers = #tpu.dot_dimension_numbers<[1], [1], [0], [0], [0, 0, 1, 0], [], []>} : vector<8x8xbf16>, vector<8x8xbf16>, vector<8x8xf32> -> vector<8x8xf32>
    %cst_35 = arith.constant dense<0xFF800000> : vector<8xf32>
    %36 = vector.multi_reduction <maximumf>, %35, %cst_35 [1] : vector<8x8xf32> to vector<8xf32>
    %37 = vector.shape_cast %36 : vector<8xf32> to vector<8x1xf32>
    %38 = vector.broadcast %37 : vector<8x1xf32> to vector<8x8xf32>
    %39 = arith.subf %35, %38 : vector<8x8xf32>
    %40 = math.exp %39 : vector<8x8xf32>
    %cst_36 = arith.constant dense<0.000000e+00> : vector<8xf32>
    %41 = vector.multi_reduction <add>, %40, %cst_36 [1] : vector<8x8xf32> to vector<8xf32>
    %42 = vector.shape_cast %41 : vector<8xf32> to vector<8x1xf32>
    %43 = tpu.reciprocal %42 {approx = true} : vector<8x1xf32> -> vector<8x1xf32>
    %44 = vector.broadcast %43 : vector<8x1xf32> to vector<8x8xf32>
    %45 = arith.mulf %40, %44 : vector<8x8xf32>
    %46 = arith.truncf %45 : vector<8x8xf32> to vector<8x8xbf16>
    %cst_37 = arith.constant dense<0.000000e+00> : vector<8x8xf32>
    %47 = tpu.matmul %46, %34, %cst_37 {dimension_numbers = #tpu.dot_dimension_numbers<[1], [0], [0], [1], [0, 0, 1, 1], [], []>} : vector<8x8xbf16>, vector<8x8xbf16>, vector<8x8xf32> -> vector<8x8xf32>
    %48 = arith.truncf %47 : vector<8x8xf32> to vector<8x8xbf16>
    %c0_38 = arith.constant 0 : index
    %c0_39 = arith.constant 0 : index
    %c0_40 = arith.constant 0 : index
    %49 = vector.load %arg7[%c0_38, %c0_39, %c0_40] : memref<4x8x32xbf16, #tpu.memory_space<vmem>>, vector<1x8x32xbf16>
    %50 = vector.shape_cast %49 : vector<1x8x32xbf16> to vector<8x32xbf16>
    %cst_41 = arith.constant dense<0.000000e+00> : vector<8x32xf32>
    %51 = tpu.matmul %48, %50, %cst_41 {dimension_numbers = #tpu.dot_dimension_numbers<[1], [0], [0], [1], [0, 0, 1, 1], [], []>} : vector<8x8xbf16>, vector<8x32xbf16>, vector<8x32xf32> -> vector<8x32xf32>
    %52 = arith.addf %26, %51 : vector<8x32xf32>
    %53 = vector.extract_strided_slice %21 {offsets = [0, 8], sizes = [8, 8], strides = [1, 1]} : vector<8x64xf32> to vector<8x8xf32>
    %cst_42 = arith.constant 0.353553385 : f32
    %54 = vector.broadcast %cst_42 : f32 to vector<8x8xf32>
    %55 = arith.mulf %53, %54 : vector<8x8xf32>
    %56 = arith.truncf %55 : vector<8x8xf32> to vector<8x8xbf16>
    %57 = vector.extract_strided_slice %21 {offsets = [0, 40], sizes = [8, 8], strides = [1, 1]} : vector<8x64xf32> to vector<8x8xf32>
    %58 = arith.truncf %57 : vector<8x8xf32> to vector<8x8xbf16>
    %59 = vector.extract_strided_slice %25 {offsets = [0, 8], sizes = [8, 8], strides = [1, 1]} : vector<8x32xf32> to vector<8x8xf32>
    %60 = arith.truncf %59 : vector<8x8xf32> to vector<8x8xbf16>
    %cst_43 = arith.constant dense<0.000000e+00> : vector<8x8xf32>
    %61 = tpu.matmul %56, %58, %cst_43 {dimension_numbers = #tpu.dot_dimension_numbers<[1], [1], [0], [0], [0, 0, 1, 0], [], []>} : vector<8x8xbf16>, vector<8x8xbf16>, vector<8x8xf32> -> vector<8x8xf32>
    %cst_44 = arith.constant dense<0xFF800000> : vector<8xf32>
    %62 = vector.multi_reduction <maximumf>, %61, %cst_44 [1] : vector<8x8xf32> to vector<8xf32>
    %63 = vector.shape_cast %62 : vector<8xf32> to vector<8x1xf32>
    %64 = vector.broadcast %63 : vector<8x1xf32> to vector<8x8xf32>
    %65 = arith.subf %61, %64 : vector<8x8xf32>
    %66 = math.exp %65 : vector<8x8xf32>
    %cst_45 = arith.constant dense<0.000000e+00> : vector<8xf32>
    %67 = vector.multi_reduction <add>, %66, %cst_45 [1] : vector<8x8xf32> to vector<8xf32>
    %68 = vector.shape_cast %67 : vector<8xf32> to vector<8x1xf32>
    %69 = tpu.reciprocal %68 {approx = true} : vector<8x1xf32> -> vector<8x1xf32>
    %70 = vector.broadcast %69 : vector<8x1xf32> to vector<8x8xf32>
    %71 = arith.mulf %66, %70 : vector<8x8xf32>
    %72 = arith.truncf %71 : vector<8x8xf32> to vector<8x8xbf16>
    %cst_46 = arith.constant dense<0.000000e+00> : vector<8x8xf32>
    %73 = tpu.matmul %72, %60, %cst_46 {dimension_numbers = #tpu.dot_dimension_numbers<[1], [0], [0], [1], [0, 0, 1, 1], [], []>} : vector<8x8xbf16>, vector<8x8xbf16>, vector<8x8xf32> -> vector<8x8xf32>
    %74 = arith.truncf %73 : vector<8x8xf32> to vector<8x8xbf16>
    %c1 = arith.constant 1 : index
    %c0_47 = arith.constant 0 : index
    %c0_48 = arith.constant 0 : index
    %75 = vector.load %arg7[%c1, %c0_47, %c0_48] : memref<4x8x32xbf16, #tpu.memory_space<vmem>>, vector<1x8x32xbf16>
    %76 = vector.shape_cast %75 : vector<1x8x32xbf16> to vector<8x32xbf16>
    %cst_49 = arith.constant dense<0.000000e+00> : vector<8x32xf32>
    %77 = tpu.matmul %74, %76, %cst_49 {dimension_numbers = #tpu.dot_dimension_numbers<[1], [0], [0], [1], [0, 0, 1, 1], [], []>} : vector<8x8xbf16>, vector<8x32xbf16>, vector<8x32xf32> -> vector<8x32xf32>
    %78 = arith.addf %52, %77 : vector<8x32xf32>
    %79 = vector.extract_strided_slice %21 {offsets = [0, 16], sizes = [8, 8], strides = [1, 1]} : vector<8x64xf32> to vector<8x8xf32>
    %cst_50 = arith.constant 0.353553385 : f32
    %80 = vector.broadcast %cst_50 : f32 to vector<8x8xf32>
    %81 = arith.mulf %79, %80 : vector<8x8xf32>
    %82 = arith.truncf %81 : vector<8x8xf32> to vector<8x8xbf16>
    %83 = vector.extract_strided_slice %21 {offsets = [0, 48], sizes = [8, 8], strides = [1, 1]} : vector<8x64xf32> to vector<8x8xf32>
    %84 = arith.truncf %83 : vector<8x8xf32> to vector<8x8xbf16>
    %85 = vector.extract_strided_slice %25 {offsets = [0, 16], sizes = [8, 8], strides = [1, 1]} : vector<8x32xf32> to vector<8x8xf32>
    %86 = arith.truncf %85 : vector<8x8xf32> to vector<8x8xbf16>
    %cst_51 = arith.constant dense<0.000000e+00> : vector<8x8xf32>
    %87 = tpu.matmul %82, %84, %cst_51 {dimension_numbers = #tpu.dot_dimension_numbers<[1], [1], [0], [0], [0, 0, 1, 0], [], []>} : vector<8x8xbf16>, vector<8x8xbf16>, vector<8x8xf32> -> vector<8x8xf32>
    %cst_52 = arith.constant dense<0xFF800000> : vector<8xf32>
    %88 = vector.multi_reduction <maximumf>, %87, %cst_52 [1] : vector<8x8xf32> to vector<8xf32>
    %89 = vector.shape_cast %88 : vector<8xf32> to vector<8x1xf32>
    %90 = vector.broadcast %89 : vector<8x1xf32> to vector<8x8xf32>
    %91 = arith.subf %87, %90 : vector<8x8xf32>
    %92 = math.exp %91 : vector<8x8xf32>
    %cst_53 = arith.constant dense<0.000000e+00> : vector<8xf32>
    %93 = vector.multi_reduction <add>, %92, %cst_53 [1] : vector<8x8xf32> to vector<8xf32>
    %94 = vector.shape_cast %93 : vector<8xf32> to vector<8x1xf32>
    %95 = tpu.reciprocal %94 {approx = true} : vector<8x1xf32> -> vector<8x1xf32>
    %96 = vector.broadcast %95 : vector<8x1xf32> to vector<8x8xf32>
    %97 = arith.mulf %92, %96 : vector<8x8xf32>
    %98 = arith.truncf %97 : vector<8x8xf32> to vector<8x8xbf16>
    %cst_54 = arith.constant dense<0.000000e+00> : vector<8x8xf32>
    %99 = tpu.matmul %98, %86, %cst_54 {dimension_numbers = #tpu.dot_dimension_numbers<[1], [0], [0], [1], [0, 0, 1, 1], [], []>} : vector<8x8xbf16>, vector<8x8xbf16>, vector<8x8xf32> -> vector<8x8xf32>
    %100 = arith.truncf %99 : vector<8x8xf32> to vector<8x8xbf16>
    %c2 = arith.constant 2 : index
    %c0_55 = arith.constant 0 : index
    %c0_56 = arith.constant 0 : index
    %101 = vector.load %arg7[%c2, %c0_55, %c0_56] : memref<4x8x32xbf16, #tpu.memory_space<vmem>>, vector<1x8x32xbf16>
    %102 = vector.shape_cast %101 : vector<1x8x32xbf16> to vector<8x32xbf16>
    %cst_57 = arith.constant dense<0.000000e+00> : vector<8x32xf32>
    %103 = tpu.matmul %100, %102, %cst_57 {dimension_numbers = #tpu.dot_dimension_numbers<[1], [0], [0], [1], [0, 0, 1, 1], [], []>} : vector<8x8xbf16>, vector<8x32xbf16>, vector<8x32xf32> -> vector<8x32xf32>
    %104 = arith.addf %78, %103 : vector<8x32xf32>
    %105 = vector.extract_strided_slice %21 {offsets = [0, 24], sizes = [8, 8], strides = [1, 1]} : vector<8x64xf32> to vector<8x8xf32>
    %cst_58 = arith.constant 0.353553385 : f32
    %106 = vector.broadcast %cst_58 : f32 to vector<8x8xf32>
    %107 = arith.mulf %105, %106 : vector<8x8xf32>
    %108 = arith.truncf %107 : vector<8x8xf32> to vector<8x8xbf16>
    %109 = vector.extract_strided_slice %21 {offsets = [0, 56], sizes = [8, 8], strides = [1, 1]} : vector<8x64xf32> to vector<8x8xf32>
    %110 = arith.truncf %109 : vector<8x8xf32> to vector<8x8xbf16>
    %111 = vector.extract_strided_slice %25 {offsets = [0, 24], sizes = [8, 8], strides = [1, 1]} : vector<8x32xf32> to vector<8x8xf32>
    %112 = arith.truncf %111 : vector<8x8xf32> to vector<8x8xbf16>
    %cst_59 = arith.constant dense<0.000000e+00> : vector<8x8xf32>
    %113 = tpu.matmul %108, %110, %cst_59 {dimension_numbers = #tpu.dot_dimension_numbers<[1], [1], [0], [0], [0, 0, 1, 0], [], []>} : vector<8x8xbf16>, vector<8x8xbf16>, vector<8x8xf32> -> vector<8x8xf32>
    %cst_60 = arith.constant dense<0xFF800000> : vector<8xf32>
    %114 = vector.multi_reduction <maximumf>, %113, %cst_60 [1] : vector<8x8xf32> to vector<8xf32>
    %115 = vector.shape_cast %114 : vector<8xf32> to vector<8x1xf32>
    %116 = vector.broadcast %115 : vector<8x1xf32> to vector<8x8xf32>
    %117 = arith.subf %113, %116 : vector<8x8xf32>
    %118 = math.exp %117 : vector<8x8xf32>
    %cst_61 = arith.constant dense<0.000000e+00> : vector<8xf32>
    %119 = vector.multi_reduction <add>, %118, %cst_61 [1] : vector<8x8xf32> to vector<8xf32>
    %120 = vector.shape_cast %119 : vector<8xf32> to vector<8x1xf32>
    %121 = tpu.reciprocal %120 {approx = true} : vector<8x1xf32> -> vector<8x1xf32>
    %122 = vector.broadcast %121 : vector<8x1xf32> to vector<8x8xf32>
    %123 = arith.mulf %118, %122 : vector<8x8xf32>
    %124 = arith.truncf %123 : vector<8x8xf32> to vector<8x8xbf16>
    %cst_62 = arith.constant dense<0.000000e+00> : vector<8x8xf32>
    %125 = tpu.matmul %124, %112, %cst_62 {dimension_numbers = #tpu.dot_dimension_numbers<[1], [0], [0], [1], [0, 0, 1, 1], [], []>} : vector<8x8xbf16>, vector<8x8xbf16>, vector<8x8xf32> -> vector<8x8xf32>
    %126 = arith.truncf %125 : vector<8x8xf32> to vector<8x8xbf16>
    %c3 = arith.constant 3 : index
    %c0_63 = arith.constant 0 : index
    %c0_64 = arith.constant 0 : index
    %127 = vector.load %arg7[%c3, %c0_63, %c0_64] : memref<4x8x32xbf16, #tpu.memory_space<vmem>>, vector<1x8x32xbf16>
    %128 = vector.shape_cast %127 : vector<1x8x32xbf16> to vector<8x32xbf16>
    %cst_65 = arith.constant dense<0.000000e+00> : vector<8x32xf32>
    %129 = tpu.matmul %126, %128, %cst_65 {dimension_numbers = #tpu.dot_dimension_numbers<[1], [0], [0], [1], [0, 0, 1, 1], [], []>} : vector<8x8xbf16>, vector<8x32xbf16>, vector<8x32xf32> -> vector<8x32xf32>
    %130 = arith.addf %104, %129 : vector<8x32xf32>
    %131 = arith.addf %14, %130 : vector<8x32xf32>
    %132 = vector.broadcast %6 : vector<1x32xf32> to vector<8x32xf32>
    %133 = arith.addf %131, %132 : vector<8x32xf32>
    %cst_66 = arith.constant dense<0.000000e+00> : vector<32xf32>
    %134 = vector.multi_reduction <add>, %133, %cst_66 [0] : vector<8x32xf32> to vector<32xf32>
    %135 = vector.shape_cast %134 : vector<32xf32> to vector<1x32xf32>
    %cst_67 = arith.constant 8.000000e+00 : f32
    %136 = vector.broadcast %cst_67 : f32 to vector<1x32xf32>
    %137 = arith.divf %135, %136 : vector<1x32xf32>
    %138 = vector.broadcast %137 : vector<1x32xf32> to vector<8x32xf32>
    %139 = arith.subf %133, %138 : vector<8x32xf32>
    %140 = arith.mulf %139, %139 : vector<8x32xf32>
    %cst_68 = arith.constant dense<0.000000e+00> : vector<32xf32>
    %141 = vector.multi_reduction <add>, %140, %cst_68 [0] : vector<8x32xf32> to vector<32xf32>
    %142 = vector.shape_cast %141 : vector<32xf32> to vector<1x32xf32>
    %cst_69 = arith.constant 8.000000e+00 : f32
    %143 = vector.broadcast %cst_69 : f32 to vector<1x32xf32>
    %144 = arith.divf %142, %143 : vector<1x32xf32>
    %145 = vector.broadcast %137 : vector<1x32xf32> to vector<8x32xf32>
    %146 = arith.subf %133, %145 : vector<8x32xf32>
    %cst_70 = arith.constant 9.99999974E-6 : f32
    %147 = vector.broadcast %cst_70 : f32 to vector<1x32xf32>
    %148 = arith.addf %144, %147 : vector<1x32xf32>
    %149 = math.rsqrt %148 : vector<1x32xf32>
    %150 = vector.broadcast %149 : vector<1x32xf32> to vector<8x32xf32>
    %151 = arith.mulf %146, %150 : vector<8x32xf32>
    %152 = vector.broadcast %9 : vector<1x32xf32> to vector<8x32xf32>
    %153 = arith.mulf %151, %152 : vector<8x32xf32>
    %154 = vector.broadcast %10 : vector<1x32xf32> to vector<8x32xf32>
    %155 = arith.addf %153, %154 : vector<8x32xf32>
    %156 = arith.truncf %155 : vector<8x32xf32> to vector<8x32xbf16>
    %cst_71 = arith.constant dense<0.000000e+00> : vector<8x64xf32>
    %157 = tpu.matmul %156, %2, %cst_71 {dimension_numbers = #tpu.dot_dimension_numbers<[1], [0], [0], [1], [0, 0, 1, 1], [], []>} : vector<8x32xbf16>, vector<32x64xbf16>, vector<8x64xf32> -> vector<8x64xf32>
    %158 = vector.broadcast %7 : vector<1x64xf32> to vector<8x64xf32>
    %159 = arith.addf %157, %158 : vector<8x64xf32>
    %cst_72 = arith.constant 0.000000e+00 : f32
    %160 = vector.broadcast %cst_72 : f32 to vector<8x64xf32>
    %161 = arith.cmpf ogt, %159, %160 : vector<8x64xf32>
    %cst_73 = arith.constant 0.00999999977 : f32
    %162 = vector.broadcast %cst_73 : f32 to vector<8x64xf32>
    %163 = arith.mulf %162, %159 : vector<8x64xf32>
    %164 = arith.select %161, %159, %163 : vector<8x64xi1>, vector<8x64xf32>
    %165 = arith.truncf %164 : vector<8x64xf32> to vector<8x64xbf16>
    %cst_74 = arith.constant dense<0.000000e+00> : vector<8x32xf32>
    %166 = tpu.matmul %165, %3, %cst_74 {dimension_numbers = #tpu.dot_dimension_numbers<[1], [0], [0], [1], [0, 0, 1, 1], [], []>} : vector<8x64xbf16>, vector<64x32xbf16>, vector<8x32xf32> -> vector<8x32xf32>
    %167 = arith.addf %155, %166 : vector<8x32xf32>
    %168 = vector.broadcast %8 : vector<1x32xf32> to vector<8x32xf32>
    %169 = arith.addf %167, %168 : vector<8x32xf32>
    %cst_75 = arith.constant dense<0.000000e+00> : vector<32xf32>
    %170 = vector.multi_reduction <add>, %169, %cst_75 [0] : vector<8x32xf32> to vector<32xf32>
    %171 = vector.shape_cast %170 : vector<32xf32> to vector<1x32xf32>
    %cst_76 = arith.constant 8.000000e+00 : f32
    %172 = vector.broadcast %cst_76 : f32 to vector<1x32xf32>
    %173 = arith.divf %171, %172 : vector<1x32xf32>
    %174 = vector.broadcast %173 : vector<1x32xf32> to vector<8x32xf32>
    %175 = arith.subf %169, %174 : vector<8x32xf32>
    %176 = arith.mulf %175, %175 : vector<8x32xf32>
    %cst_77 = arith.constant dense<0.000000e+00> : vector<32xf32>
    %177 = vector.multi_reduction <add>, %176, %cst_77 [0] : vector<8x32xf32> to vector<32xf32>
    %178 = vector.shape_cast %177 : vector<32xf32> to vector<1x32xf32>
    %cst_78 = arith.constant 8.000000e+00 : f32
    %179 = vector.broadcast %cst_78 : f32 to vector<1x32xf32>
    %180 = arith.divf %178, %179 : vector<1x32xf32>
    %181 = vector.broadcast %173 : vector<1x32xf32> to vector<8x32xf32>
    %182 = arith.subf %169, %181 : vector<8x32xf32>
    %cst_79 = arith.constant 9.99999974E-6 : f32
    %183 = vector.broadcast %cst_79 : f32 to vector<1x32xf32>
    %184 = arith.addf %180, %183 : vector<1x32xf32>
    %185 = math.rsqrt %184 : vector<1x32xf32>
    %186 = vector.broadcast %185 : vector<1x32xf32> to vector<8x32xf32>
    %187 = arith.mulf %182, %186 : vector<8x32xf32>
    %188 = vector.broadcast %11 : vector<1x32xf32> to vector<8x32xf32>
    %189 = arith.mulf %187, %188 : vector<8x32xf32>
    %190 = vector.broadcast %12 : vector<1x32xf32> to vector<8x32xf32>
    %191 = arith.addf %189, %190 : vector<8x32xf32>
    %c0_80 = arith.constant 0 : index
    %c0_81 = arith.constant 0 : index
    %c0_82 = arith.constant 0 : index
    %192 = vector.load %arg17[%c0_80, %c0_81, %c0_82] : memref<2x8x32xf32, #tpu.memory_space<vmem>>, vector<1x8x32xf32>
    %193 = vector.shape_cast %192 : vector<1x8x32xf32> to vector<8x32xf32>
    %194 = vector.shape_cast %191 : vector<8x32xf32> to vector<1x8x32xf32>
    tpu.vector_store %arg17[%c0_80, %c0_81, %c0_82], %194 {strides = array<i32>} : memref<2x8x32xf32, #tpu.memory_space<vmem>>, vector<1x8x32xf32>,
    %c1_83 = arith.constant 1 : index
    %c0_84 = arith.constant 0 : index
    %c0_85 = arith.constant 0 : index
    %195 = vector.load %arg1[%c1_83, %c0_84, %c0_85] : memref<2x8x32xf32, #tpu.memory_space<vmem>>, vector<1x8x32xf32>
    %196 = vector.shape_cast %195 : vector<1x8x32xf32> to vector<8x32xf32>
    %c1_86 = arith.constant 1 : index
    %c0_87 = arith.constant 0 : index
    %c0_88 = arith.constant 0 : index
    %197 = vector.load %arg2[%c1_86, %c0_87, %c0_88] : memref<2x8x32xf32, #tpu.memory_space<vmem>>, vector<1x8x32xf32>
    %198 = vector.shape_cast %197 : vector<1x8x32xf32> to vector<8x32xf32>
    %199 = arith.addf %196, %198 : vector<8x32xf32>
    %200 = arith.truncf %199 : vector<8x32xf32> to vector<8x32xbf16>
    %cst_89 = arith.constant dense<0.000000e+00> : vector<8x64xf32>
    %201 = tpu.matmul %200, %0, %cst_89 {dimension_numbers = #tpu.dot_dimension_numbers<[1], [0], [0], [1], [0, 0, 1, 1], [], []>} : vector<8x32xbf16>, vector<32x64xbf16>, vector<8x64xf32> -> vector<8x64xf32>
    %202 = vector.broadcast %4 : vector<1x64xf32> to vector<8x64xf32>
    %203 = arith.addf %201, %202 : vector<8x64xf32>
    %204 = arith.truncf %196 : vector<8x32xf32> to vector<8x32xbf16>
    %cst_90 = arith.constant dense<0.000000e+00> : vector<8x32xf32>
    %205 = tpu.matmul %204, %1, %cst_90 {dimension_numbers = #tpu.dot_dimension_numbers<[1], [0], [0], [1], [0, 0, 1, 1], [], []>} : vector<8x32xbf16>, vector<32x32xbf16>, vector<8x32xf32> -> vector<8x32xf32>
    %206 = vector.broadcast %5 : vector<1x32xf32> to vector<8x32xf32>
    %207 = arith.addf %205, %206 : vector<8x32xf32>
    %cst_91 = arith.constant 0.000000e+00 : f32
    %208 = vector.broadcast %cst_91 : f32 to vector<8x32xf32>
    %209 = vector.extract_strided_slice %203 {offsets = [0, 0], sizes = [8, 8], strides = [1, 1]} : vector<8x64xf32> to vector<8x8xf32>
    %cst_92 = arith.constant 0.353553385 : f32
    %210 = vector.broadcast %cst_92 : f32 to vector<8x8xf32>
    %211 = arith.mulf %209, %210 : vector<8x8xf32>
    %212 = arith.truncf %211 : vector<8x8xf32> to vector<8x8xbf16>
    %213 = vector.extract_strided_slice %203 {offsets = [0, 32], sizes = [8, 8], strides = [1, 1]} : vector<8x64xf32> to vector<8x8xf32>
    %214 = arith.truncf %213 : vector<8x8xf32> to vector<8x8xbf16>
    %215 = vector.extract_strided_slice %207 {offsets = [0, 0], sizes = [8, 8], strides = [1, 1]} : vector<8x32xf32> to vector<8x8xf32>
    %216 = arith.truncf %215 : vector<8x8xf32> to vector<8x8xbf16>
    %cst_93 = arith.constant dense<0.000000e+00> : vector<8x8xf32>
    %217 = tpu.matmul %212, %214, %cst_93 {dimension_numbers = #tpu.dot_dimension_numbers<[1], [1], [0], [0], [0, 0, 1, 0], [], []>} : vector<8x8xbf16>, vector<8x8xbf16>, vector<8x8xf32> -> vector<8x8xf32>
    %cst_94 = arith.constant dense<0xFF800000> : vector<8xf32>
    %218 = vector.multi_reduction <maximumf>, %217, %cst_94 [1] : vector<8x8xf32> to vector<8xf32>
    %219 = vector.shape_cast %218 : vector<8xf32> to vector<8x1xf32>
    %220 = vector.broadcast %219 : vector<8x1xf32> to vector<8x8xf32>
    %221 = arith.subf %217, %220 : vector<8x8xf32>
    %222 = math.exp %221 : vector<8x8xf32>
    %cst_95 = arith.constant dense<0.000000e+00> : vector<8xf32>
    %223 = vector.multi_reduction <add>, %222, %cst_95 [1] : vector<8x8xf32> to vector<8xf32>
    %224 = vector.shape_cast %223 : vector<8xf32> to vector<8x1xf32>
    %225 = tpu.reciprocal %224 {approx = true} : vector<8x1xf32> -> vector<8x1xf32>
    %226 = vector.broadcast %225 : vector<8x1xf32> to vector<8x8xf32>
    %227 = arith.mulf %222, %226 : vector<8x8xf32>
    %228 = arith.truncf %227 : vector<8x8xf32> to vector<8x8xbf16>
    %cst_96 = arith.constant dense<0.000000e+00> : vector<8x8xf32>
    %229 = tpu.matmul %228, %216, %cst_96 {dimension_numbers = #tpu.dot_dimension_numbers<[1], [0], [0], [1], [0, 0, 1, 1], [], []>} : vector<8x8xbf16>, vector<8x8xbf16>, vector<8x8xf32> -> vector<8x8xf32>
    %230 = arith.truncf %229 : vector<8x8xf32> to vector<8x8xbf16>
    %c0_97 = arith.constant 0 : index
    %c0_98 = arith.constant 0 : index
    %c0_99 = arith.constant 0 : index
    %231 = vector.load %arg7[%c0_97, %c0_98, %c0_99] : memref<4x8x32xbf16, #tpu.memory_space<vmem>>, vector<1x8x32xbf16>
    %232 = vector.shape_cast %231 : vector<1x8x32xbf16> to vector<8x32xbf16>
    %cst_100 = arith.constant dense<0.000000e+00> : vector<8x32xf32>
    %233 = tpu.matmul %230, %232, %cst_100 {dimension_numbers = #tpu.dot_dimension_numbers<[1], [0], [0], [1], [0, 0, 1, 1], [], []>} : vector<8x8xbf16>, vector<8x32xbf16>, vector<8x32xf32> -> vector<8x32xf32>
    %234 = arith.addf %208, %233 : vector<8x32xf32>
    %235 = vector.extract_strided_slice %203 {offsets = [0, 8], sizes = [8, 8], strides = [1, 1]} : vector<8x64xf32> to vector<8x8xf32>
    %cst_101 = arith.constant 0.353553385 : f32
    %236 = vector.broadcast %cst_101 : f32 to vector<8x8xf32>
    %237 = arith.mulf %235, %236 : vector<8x8xf32>
    %238 = arith.truncf %237 : vector<8x8xf32> to vector<8x8xbf16>
    %239 = vector.extract_strided_slice %203 {offsets = [0, 40], sizes = [8, 8], strides = [1, 1]} : vector<8x64xf32> to vector<8x8xf32>
    %240 = arith.truncf %239 : vector<8x8xf32> to vector<8x8xbf16>
    %241 = vector.extract_strided_slice %207 {offsets = [0, 8], sizes = [8, 8], strides = [1, 1]} : vector<8x32xf32> to vector<8x8xf32>
    %242 = arith.truncf %241 : vector<8x8xf32> to vector<8x8xbf16>
    %cst_102 = arith.constant dense<0.000000e+00> : vector<8x8xf32>
    %243 = tpu.matmul %238, %240, %cst_102 {dimension_numbers = #tpu.dot_dimension_numbers<[1], [1], [0], [0], [0, 0, 1, 0], [], []>} : vector<8x8xbf16>, vector<8x8xbf16>, vector<8x8xf32> -> vector<8x8xf32>
    %cst_103 = arith.constant dense<0xFF800000> : vector<8xf32>
    %244 = vector.multi_reduction <maximumf>, %243, %cst_103 [1] : vector<8x8xf32> to vector<8xf32>
    %245 = vector.shape_cast %244 : vector<8xf32> to vector<8x1xf32>
    %246 = vector.broadcast %245 : vector<8x1xf32> to vector<8x8xf32>
    %247 = arith.subf %243, %246 : vector<8x8xf32>
    %248 = math.exp %247 : vector<8x8xf32>
    %cst_104 = arith.constant dense<0.000000e+00> : vector<8xf32>
    %249 = vector.multi_reduction <add>, %248, %cst_104 [1] : vector<8x8xf32> to vector<8xf32>
    %250 = vector.shape_cast %249 : vector<8xf32> to vector<8x1xf32>
    %251 = tpu.reciprocal %250 {approx = true} : vector<8x1xf32> -> vector<8x1xf32>
    %252 = vector.broadcast %251 : vector<8x1xf32> to vector<8x8xf32>
    %253 = arith.mulf %248, %252 : vector<8x8xf32>
    %254 = arith.truncf %253 : vector<8x8xf32> to vector<8x8xbf16>
    %cst_105 = arith.constant dense<0.000000e+00> : vector<8x8xf32>
    %255 = tpu.matmul %254, %242, %cst_105 {dimension_numbers = #tpu.dot_dimension_numbers<[1], [0], [0], [1], [0, 0, 1, 1], [], []>} : vector<8x8xbf16>, vector<8x8xbf16>, vector<8x8xf32> -> vector<8x8xf32>
    %256 = arith.truncf %255 : vector<8x8xf32> to vector<8x8xbf16>
    %c1_106 = arith.constant 1 : index
    %c0_107 = arith.constant 0 : index
    %c0_108 = arith.constant 0 : index
    %257 = vector.load %arg7[%c1_106, %c0_107, %c0_108] : memref<4x8x32xbf16, #tpu.memory_space<vmem>>, vector<1x8x32xbf16>
    %258 = vector.shape_cast %257 : vector<1x8x32xbf16> to vector<8x32xbf16>
    %cst_109 = arith.constant dense<0.000000e+00> : vector<8x32xf32>
    %259 = tpu.matmul %256, %258, %cst_109 {dimension_numbers = #tpu.dot_dimension_numbers<[1], [0], [0], [1], [0, 0, 1, 1], [], []>} : vector<8x8xbf16>, vector<8x32xbf16>, vector<8x32xf32> -> vector<8x32xf32>
    %260 = arith.addf %234, %259 : vector<8x32xf32>
    %261 = vector.extract_strided_slice %203 {offsets = [0, 16], sizes = [8, 8], strides = [1, 1]} : vector<8x64xf32> to vector<8x8xf32>
    %cst_110 = arith.constant 0.353553385 : f32
    %262 = vector.broadcast %cst_110 : f32 to vector<8x8xf32>
    %263 = arith.mulf %261, %262 : vector<8x8xf32>
    %264 = arith.truncf %263 : vector<8x8xf32> to vector<8x8xbf16>
    %265 = vector.extract_strided_slice %203 {offsets = [0, 48], sizes = [8, 8], strides = [1, 1]} : vector<8x64xf32> to vector<8x8xf32>
    %266 = arith.truncf %265 : vector<8x8xf32> to vector<8x8xbf16>
    %267 = vector.extract_strided_slice %207 {offsets = [0, 16], sizes = [8, 8], strides = [1, 1]} : vector<8x32xf32> to vector<8x8xf32>
    %268 = arith.truncf %267 : vector<8x8xf32> to vector<8x8xbf16>
    %cst_111 = arith.constant dense<0.000000e+00> : vector<8x8xf32>
    %269 = tpu.matmul %264, %266, %cst_111 {dimension_numbers = #tpu.dot_dimension_numbers<[1], [1], [0], [0], [0, 0, 1, 0], [], []>} : vector<8x8xbf16>, vector<8x8xbf16>, vector<8x8xf32> -> vector<8x8xf32>
    %cst_112 = arith.constant dense<0xFF800000> : vector<8xf32>
    %270 = vector.multi_reduction <maximumf>, %269, %cst_112 [1] : vector<8x8xf32> to vector<8xf32>
    %271 = vector.shape_cast %270 : vector<8xf32> to vector<8x1xf32>
    %272 = vector.broadcast %271 : vector<8x1xf32> to vector<8x8xf32>
    %273 = arith.subf %269, %272 : vector<8x8xf32>
    %274 = math.exp %273 : vector<8x8xf32>
    %cst_113 = arith.constant dense<0.000000e+00> : vector<8xf32>
    %275 = vector.multi_reduction <add>, %274, %cst_113 [1] : vector<8x8xf32> to vector<8xf32>
    %276 = vector.shape_cast %275 : vector<8xf32> to vector<8x1xf32>
    %277 = tpu.reciprocal %276 {approx = true} : vector<8x1xf32> -> vector<8x1xf32>
    %278 = vector.broadcast %277 : vector<8x1xf32> to vector<8x8xf32>
    %279 = arith.mulf %274, %278 : vector<8x8xf32>
    %280 = arith.truncf %279 : vector<8x8xf32> to vector<8x8xbf16>
    %cst_114 = arith.constant dense<0.000000e+00> : vector<8x8xf32>
    %281 = tpu.matmul %280, %268, %cst_114 {dimension_numbers = #tpu.dot_dimension_numbers<[1], [0], [0], [1], [0, 0, 1, 1], [], []>} : vector<8x8xbf16>, vector<8x8xbf16>, vector<8x8xf32> -> vector<8x8xf32>
    %282 = arith.truncf %281 : vector<8x8xf32> to vector<8x8xbf16>
    %c2_115 = arith.constant 2 : index
    %c0_116 = arith.constant 0 : index
    %c0_117 = arith.constant 0 : index
    %283 = vector.load %arg7[%c2_115, %c0_116, %c0_117] : memref<4x8x32xbf16, #tpu.memory_space<vmem>>, vector<1x8x32xbf16>
    %284 = vector.shape_cast %283 : vector<1x8x32xbf16> to vector<8x32xbf16>
    %cst_118 = arith.constant dense<0.000000e+00> : vector<8x32xf32>
    %285 = tpu.matmul %282, %284, %cst_118 {dimension_numbers = #tpu.dot_dimension_numbers<[1], [0], [0], [1], [0, 0, 1, 1], [], []>} : vector<8x8xbf16>, vector<8x32xbf16>, vector<8x32xf32> -> vector<8x32xf32>
    %286 = arith.addf %260, %285 : vector<8x32xf32>
    %287 = vector.extract_strided_slice %203 {offsets = [0, 24], sizes = [8, 8], strides = [1, 1]} : vector<8x64xf32> to vector<8x8xf32>
    %cst_119 = arith.constant 0.353553385 : f32
    %288 = vector.broadcast %cst_119 : f32 to vector<8x8xf32>
    %289 = arith.mulf %287, %288 : vector<8x8xf32>
    %290 = arith.truncf %289 : vector<8x8xf32> to vector<8x8xbf16>
    %291 = vector.extract_strided_slice %203 {offsets = [0, 56], sizes = [8, 8], strides = [1, 1]} : vector<8x64xf32> to vector<8x8xf32>
    %292 = arith.truncf %291 : vector<8x8xf32> to vector<8x8xbf16>
    %293 = vector.extract_strided_slice %207 {offsets = [0, 24], sizes = [8, 8], strides = [1, 1]} : vector<8x32xf32> to vector<8x8xf32>
    %294 = arith.truncf %293 : vector<8x8xf32> to vector<8x8xbf16>
    %cst_120 = arith.constant dense<0.000000e+00> : vector<8x8xf32>
    %295 = tpu.matmul %290, %292, %cst_120 {dimension_numbers = #tpu.dot_dimension_numbers<[1], [1], [0], [0], [0, 0, 1, 0], [], []>} : vector<8x8xbf16>, vector<8x8xbf16>, vector<8x8xf32> -> vector<8x8xf32>
    %cst_121 = arith.constant dense<0xFF800000> : vector<8xf32>
    %296 = vector.multi_reduction <maximumf>, %295, %cst_121 [1] : vector<8x8xf32> to vector<8xf32>
    %297 = vector.shape_cast %296 : vector<8xf32> to vector<8x1xf32>
    %298 = vector.broadcast %297 : vector<8x1xf32> to vector<8x8xf32>
    %299 = arith.subf %295, %298 : vector<8x8xf32>
    %300 = math.exp %299 : vector<8x8xf32>
    %cst_122 = arith.constant dense<0.000000e+00> : vector<8xf32>
    %301 = vector.multi_reduction <add>, %300, %cst_122 [1] : vector<8x8xf32> to vector<8xf32>
    %302 = vector.shape_cast %301 : vector<8xf32> to vector<8x1xf32>
    %303 = tpu.reciprocal %302 {approx = true} : vector<8x1xf32> -> vector<8x1xf32>
    %304 = vector.broadcast %303 : vector<8x1xf32> to vector<8x8xf32>
    %305 = arith.mulf %300, %304 : vector<8x8xf32>
    %306 = arith.truncf %305 : vector<8x8xf32> to vector<8x8xbf16>
    %cst_123 = arith.constant dense<0.000000e+00> : vector<8x8xf32>
    %307 = tpu.matmul %306, %294, %cst_123 {dimension_numbers = #tpu.dot_dimension_numbers<[1], [0], [0], [1], [0, 0, 1, 1], [], []>} : vector<8x8xbf16>, vector<8x8xbf16>, vector<8x8xf32> -> vector<8x8xf32>
    %308 = arith.truncf %307 : vector<8x8xf32> to vector<8x8xbf16>
    %c3_124 = arith.constant 3 : index
    %c0_125 = arith.constant 0 : index
    %c0_126 = arith.constant 0 : index
    %309 = vector.load %arg7[%c3_124, %c0_125, %c0_126] : memref<4x8x32xbf16, #tpu.memory_space<vmem>>, vector<1x8x32xbf16>
    %310 = vector.shape_cast %309 : vector<1x8x32xbf16> to vector<8x32xbf16>
    %cst_127 = arith.constant dense<0.000000e+00> : vector<8x32xf32>
    %311 = tpu.matmul %308, %310, %cst_127 {dimension_numbers = #tpu.dot_dimension_numbers<[1], [0], [0], [1], [0, 0, 1, 1], [], []>} : vector<8x8xbf16>, vector<8x32xbf16>, vector<8x32xf32> -> vector<8x32xf32>
    %312 = arith.addf %286, %311 : vector<8x32xf32>
    %313 = arith.addf %196, %312 : vector<8x32xf32>
    %314 = vector.broadcast %6 : vector<1x32xf32> to vector<8x32xf32>
    %315 = arith.addf %313, %314 : vector<8x32xf32>
    %cst_128 = arith.constant dense<0.000000e+00> : vector<32xf32>
    %316 = vector.multi_reduction <add>, %315, %cst_128 [0] : vector<8x32xf32> to vector<32xf32>
    %317 = vector.shape_cast %316 : vector<32xf32> to vector<1x32xf32>
    %cst_129 = arith.constant 8.000000e+00 : f32
    %318 = vector.broadcast %cst_129 : f32 to vector<1x32xf32>
    %319 = arith.divf %317, %318 : vector<1x32xf32>
    %320 = vector.broadcast %319 : vector<1x32xf32> to vector<8x32xf32>
    %321 = arith.subf %315, %320 : vector<8x32xf32>
    %322 = arith.mulf %321, %321 : vector<8x32xf32>
    %cst_130 = arith.constant dense<0.000000e+00> : vector<32xf32>
    %323 = vector.multi_reduction <add>, %322, %cst_130 [0] : vector<8x32xf32> to vector<32xf32>
    %324 = vector.shape_cast %323 : vector<32xf32> to vector<1x32xf32>
    %cst_131 = arith.constant 8.000000e+00 : f32
    %325 = vector.broadcast %cst_131 : f32 to vector<1x32xf32>
    %326 = arith.divf %324, %325 : vector<1x32xf32>
    %327 = vector.broadcast %319 : vector<1x32xf32> to vector<8x32xf32>
    %328 = arith.subf %315, %327 : vector<8x32xf32>
    %cst_132 = arith.constant 9.99999974E-6 : f32
    %329 = vector.broadcast %cst_132 : f32 to vector<1x32xf32>
    %330 = arith.addf %326, %329 : vector<1x32xf32>
    %331 = math.rsqrt %330 : vector<1x32xf32>
    %332 = vector.broadcast %331 : vector<1x32xf32> to vector<8x32xf32>
    %333 = arith.mulf %328, %332 : vector<8x32xf32>
    %334 = vector.broadcast %9 : vector<1x32xf32> to vector<8x32xf32>
    %335 = arith.mulf %333, %334 : vector<8x32xf32>
    %336 = vector.broadcast %10 : vector<1x32xf32> to vector<8x32xf32>
    %337 = arith.addf %335, %336 : vector<8x32xf32>
    %338 = arith.truncf %337 : vector<8x32xf32> to vector<8x32xbf16>
    %cst_133 = arith.constant dense<0.000000e+00> : vector<8x64xf32>
    %339 = tpu.matmul %338, %2, %cst_133 {dimension_numbers = #tpu.dot_dimension_numbers<[1], [0], [0], [1], [0, 0, 1, 1], [], []>} : vector<8x32xbf16>, vector<32x64xbf16>, vector<8x64xf32> -> vector<8x64xf32>
    %340 = vector.broadcast %7 : vector<1x64xf32> to vector<8x64xf32>
    %341 = arith.addf %339, %340 : vector<8x64xf32>
    %cst_134 = arith.constant 0.000000e+00 : f32
    %342 = vector.broadcast %cst_134 : f32 to vector<8x64xf32>
    %343 = arith.cmpf ogt, %341, %342 : vector<8x64xf32>
    %cst_135 = arith.constant 0.00999999977 : f32
    %344 = vector.broadcast %cst_135 : f32 to vector<8x64xf32>
    %345 = arith.mulf %344, %341 : vector<8x64xf32>
    %346 = arith.select %343, %341, %345 : vector<8x64xi1>, vector<8x64xf32>
    %347 = arith.truncf %346 : vector<8x64xf32> to vector<8x64xbf16>
    %cst_136 = arith.constant dense<0.000000e+00> : vector<8x32xf32>
    %348 = tpu.matmul %347, %3, %cst_136 {dimension_numbers = #tpu.dot_dimension_numbers<[1], [0], [0], [1], [0, 0, 1, 1], [], []>} : vector<8x64xbf16>, vector<64x32xbf16>, vector<8x32xf32> -> vector<8x32xf32>
    %349 = arith.addf %337, %348 : vector<8x32xf32>
    %350 = vector.broadcast %8 : vector<1x32xf32> to vector<8x32xf32>
    %351 = arith.addf %349, %350 : vector<8x32xf32>
    %cst_137 = arith.constant dense<0.000000e+00> : vector<32xf32>
    %352 = vector.multi_reduction <add>, %351, %cst_137 [0] : vector<8x32xf32> to vector<32xf32>
    %353 = vector.shape_cast %352 : vector<32xf32> to vector<1x32xf32>
    %cst_138 = arith.constant 8.000000e+00 : f32
    %354 = vector.broadcast %cst_138 : f32 to vector<1x32xf32>
    %355 = arith.divf %353, %354 : vector<1x32xf32>
    %356 = vector.broadcast %355 : vector<1x32xf32> to vector<8x32xf32>
    %357 = arith.subf %351, %356 : vector<8x32xf32>
    %358 = arith.mulf %357, %357 : vector<8x32xf32>
    %cst_139 = arith.constant dense<0.000000e+00> : vector<32xf32>
    %359 = vector.multi_reduction <add>, %358, %cst_139 [0] : vector<8x32xf32> to vector<32xf32>
    %360 = vector.shape_cast %359 : vector<32xf32> to vector<1x32xf32>
    %cst_140 = arith.constant 8.000000e+00 : f32
    %361 = vector.broadcast %cst_140 : f32 to vector<1x32xf32>
    %362 = arith.divf %360, %361 : vector<1x32xf32>
    %363 = vector.broadcast %355 : vector<1x32xf32> to vector<8x32xf32>
    %364 = arith.subf %351, %363 : vector<8x32xf32>
    %cst_141 = arith.constant 9.99999974E-6 : f32
    %365 = vector.broadcast %cst_141 : f32 to vector<1x32xf32>
    %366 = arith.addf %362, %365 : vector<1x32xf32>
    %367 = math.rsqrt %366 : vector<1x32xf32>
    %368 = vector.broadcast %367 : vector<1x32xf32> to vector<8x32xf32>
    %369 = arith.mulf %364, %368 : vector<8x32xf32>
    %370 = vector.broadcast %11 : vector<1x32xf32> to vector<8x32xf32>
    %371 = arith.mulf %369, %370 : vector<8x32xf32>
    %372 = vector.broadcast %12 : vector<1x32xf32> to vector<8x32xf32>
    %373 = arith.addf %371, %372 : vector<8x32xf32>
    %c1_142 = arith.constant 1 : index
    %c0_143 = arith.constant 0 : index
    %c0_144 = arith.constant 0 : index
    %374 = vector.load %arg17[%c1_142, %c0_143, %c0_144] : memref<2x8x32xf32, #tpu.memory_space<vmem>>, vector<1x8x32xf32>
    %375 = vector.shape_cast %374 : vector<1x8x32xf32> to vector<8x32xf32>
    %376 = vector.shape_cast %373 : vector<8x32xf32> to vector<1x8x32xf32>
    tpu.vector_store %arg17[%c1_142, %c0_143, %c0_144], %376 {strides = array<i32>} : memref<2x8x32xf32, #tpu.memory_space<vmem>>, vector<1x8x32xf32>,
    return
  }
  func.func @transform_0(%arg0: i32) -> (i32, i32, i32) {
    %c0_i32 = arith.constant 0 : i32
    %c0_i32_0 = arith.constant 0 : i32
    %c0_i32_1 = arith.constant 0 : i32
    return %arg0, %c0_i32, %c0_i32_0 : i32, i32, i32
  }
  func.func @transform_1(%arg0: i32) -> (i32, i32, i32) {
    %c0_i32 = arith.constant 0 : i32
    %c0_i32_0 = arith.constant 0 : i32
    %c0_i32_1 = arith.constant 0 : i32
    return %arg0, %c0_i32, %c0_i32_0 : i32, i32, i32
  }
  func.func @transform_2(%arg0: i32) -> (i32, i32) {
    %c0_i32 = arith.constant 0 : i32
    %c0_i32_0 = arith.constant 0 : i32
    %c0_i32_1 = arith.constant 0 : i32
    return %c0_i32, %c0_i32_0 : i32, i32
  }
  func.func @transform_3(%arg0: i32) -> (i32, i32) {
    %c0_i32 = arith.constant 0 : i32
    %c0_i32_0 = arith.constant 0 : i32
    %c0_i32_1 = arith.constant 0 : i32
    return %c0_i32, %c0_i32_0 : i32, i32
  }
  func.func @transform_4(%arg0: i32) -> (i32, i32) {
    %c0_i32 = arith.constant 0 : i32
    %c0_i32_0 = arith.constant 0 : i32
    %c0_i32_1 = arith.constant 0 : i32
    return %c0_i32, %c0_i32_0 : i32, i32
  }
  func.func @transform_5(%arg0: i32) -> (i32, i32) {
    %c0_i32 = arith.constant 0 : i32
    %c0_i32_0 = arith.constant 0 : i32
    %c0_i32_1 = arith.constant 0 : i32
    return %c0_i32, %c0_i32_0 : i32, i32
  }
  func.func @transform_6(%arg0: i32) -> (i32, i32, i32) {
    %c0_i32 = arith.constant 0 : i32
    %c0_i32_0 = arith.constant 0 : i32
    %c0_i32_1 = arith.constant 0 : i32
    %c0_i32_2 = arith.constant 0 : i32
    return %c0_i32, %c0_i32_0, %c0_i32_1 : i32, i32, i32
  }
  func.func @transform_7(%arg0: i32) -> (i32, i32) {
    %c0_i32 = arith.constant 0 : i32
    %c0_i32_0 = arith.constant 0 : i32
    %c0_i32_1 = arith.constant 0 : i32
    return %c0_i32, %c0_i32_0 : i32, i32
  }
  func.func @transform_8(%arg0: i32) -> (i32, i32) {
    %c0_i32 = arith.constant 0 : i32
    %c0_i32_0 = arith.constant 0 : i32
    %c0_i32_1 = arith.constant 0 : i32
    return %c0_i32, %c0_i32_0 : i32, i32
  }
  func.func @transform_9(%arg0: i32) -> (i32, i32) {
    %c0_i32 = arith.constant 0 : i32
    %c0_i32_0 = arith.constant 0 : i32
    %c0_i32_1 = arith.constant 0 : i32
    return %c0_i32, %c0_i32_0 : i32, i32
  }
  func.func @transform_10(%arg0: i32) -> (i32, i32) {
    %c0_i32 = arith.constant 0 : i32
    %c0_i32_0 = arith.constant 0 : i32
    %c0_i32_1 = arith.constant 0 : i32
    return %c0_i32, %c0_i32_0 : i32, i32
  }
  func.func @transform_11(%arg0: i32) -> (i32, i32) {
    %c0_i32 = arith.constant 0 : i32
    %c0_i32_0 = arith.constant 0 : i32
    %c0_i32_1 = arith.constant 0 : i32
    return %c0_i32, %c0_i32_0 : i32, i32
  }
  func.func @transform_12(%arg0: i32) -> (i32, i32) {
    %c0_i32 = arith.constant 0 : i32
    %c0_i32_0 = arith.constant 0 : i32
    %c0_i32_1 = arith.constant 0 : i32
    return %c0_i32, %c0_i32_0 : i32, i32
  }
  func.func @transform_13(%arg0: i32) -> (i32, i32) {
    %c0_i32 = arith.constant 0 : i32
    %c0_i32_0 = arith.constant 0 : i32
    %c0_i32_1 = arith.constant 0 : i32
    return %c0_i32, %c0_i32_0 : i32, i32
  }
  func.func @transform_14(%arg0: i32) -> (i32, i32) {
    %c0_i32 = arith.constant 0 : i32
    %c0_i32_0 = arith.constant 0 : i32
    %c0_i32_1 = arith.constant 0 : i32
    return %c0_i32, %c0_i32_0 : i32, i32
  }
  func.func @transform_15(%arg0: i32) -> (i32, i32) {
    %c0_i32 = arith.constant 0 : i32
    %c0_i32_0 = arith.constant 0 : i32
    %c0_i32_1 = arith.constant 0 : i32
    return %c0_i32, %c0_i32_0 : i32, i32
  }
  func.func @transform_16(%arg0: i32) -> (i32, i32, i32) {
    %c0_i32 = arith.constant 0 : i32
    %c0_i32_0 = arith.constant 0 : i32
    %c0_i32_1 = arith.constant 0 : i32
    return %arg0, %c0_i32, %c0_i32_0 : i32, i32, i32
  }
}

</mosaic_0001>

<llo_original>
// kernel: tpu_custom_call.1
$region0: #{tpu_custom_call.1}
  #allocation0 [shape = 'u32[]', space=smem, size = 0x4, offset = 0x4, fixed_abs, tag = 'smem constant byte address 0x4 - core index']
  #allocation1 [shape = 'u32[72,128]{1,0:T(1,128)}', space=vmem, size = 0x9000, scoped, tag = 'internal scratch']
  %s0 = inlined_call_operand.vmem [shape: f32[4,8,32], index: 0, kind: input, shape index: {}]
  %s1 = inlined_call_operand.hbm [shape: f32[4,8,32], index: 1, kind: input, shape index: {}]
  %s2 = inlined_call_operand.vmem [shape: bf16[32,64], index: 2, kind: input, shape index: {}]
  %s3 = inlined_call_operand.vmem [shape: f32[1,64], index: 3, kind: input, shape index: {}]
  %s4 = inlined_call_operand.hbm [shape: bf16[32,32], index: 4, kind: input, shape index: {}]
  %s5 = inlined_call_operand.vmem [shape: f32[1,32], index: 5, kind: input, shape index: {}]
  %s6 = inlined_call_operand.hbm [shape: bf16[4,8,32], index: 6, kind: input, shape index: {}]
  %s7 = inlined_call_operand.vmem [shape: f32[1,32], index: 7, kind: input, shape index: {}]
  %s8 = inlined_call_operand.vmem [shape: f32[1,32], index: 8, kind: input, shape index: {}]
  %s9 = inlined_call_operand.vmem [shape: f32[1,32], index: 9, kind: input, shape index: {}]
  %s10 = inlined_call_operand.hbm [shape: bf16[32,64], index: 10, kind: input, shape index: {}]
  %s11 = inlined_call_operand.vmem [shape: f32[1,64], index: 11, kind: input, shape index: {}]
  %s12 = inlined_call_operand.vmem [shape: bf16[64,32], index: 12, kind: input, shape index: {}]
  %s13 = inlined_call_operand.vmem [shape: f32[1,32], index: 13, kind: input, shape index: {}]
  %s14 = inlined_call_operand.vmem [shape: f32[1,32], index: 14, kind: input, shape index: {}]
  %s15 = inlined_call_operand.vmem [shape: f32[1,32], index: 15, kind: input, shape index: {}]
  %s16 = inlined_call_operand.hbm [shape: f32[4,8,32], index: 16, kind: output, shape index: {}]
  %s17 = sld [smem:[#allocation0]]
  $region113: #{tpu_custom_call.1} parent=0
    _
  %s19 = ssub.s32 1, %s17
  %s20 = scalar_select 0, %s19, %s17
  $region1: #{tpu_custom_call.1} parent=0
    #allocation2 [shape = 'u8[16384]{0}', space=vmem, size = 0x4000, scoped, tag = 'input window, operand 1']
    #allocation3 [shape = 's32[2]{0}', space=sflag, size = 0x8, scoped, tag = 'scoped memory for tpu_custom_call.1']
    #allocation4 [shape = 's32[2]{0}', space=sflag, size = 0x8, scoped, tag = 'scoped memory for tpu_custom_call.1']
    #allocation5 [shape = 'u8[8192]{0}', space=vmem, size = 0x2000, scoped, tag = 'input window, operand 4, single buffered']
    #allocation6 [shape = 's32[1]{0}', space=sflag, size = 0x4, scoped, tag = 'scoped memory for tpu_custom_call.1']
    #allocation7 [shape = 'u8[8192]{0}', space=vmem, size = 0x2000, scoped, tag = 'input window, operand 6, single buffered']
    #allocation8 [shape = 'u8[8192]{0}', space=vmem, size = 0x2000, scoped, tag = 'input window, operand 10, single buffered']
    #allocation9 [shape = 's32[1]{0}', space=sflag, size = 0x4, scoped, tag = 'scoped memory for tpu_custom_call.1']
    #allocation10 [shape = 'u8[16384]{0}', space=vmem, size = 0x4000, scoped, tag = 'output window, operand 0']
    %21 = vsyncpa [#allocation3], 0
    %s22 = scalar_lea.sflag [#allocation3], 1
    %23 = vsyncpa %s22, 0
    %24 = vsyncpa [#allocation6], 0
    %25 = vsyncpa [#allocation9], 0
    %26 = vsyncpa [#allocation4], 0
    %s27 = scalar_lea.sflag [#allocation4], 1
    %28 = vsyncpa %s27, 0
    loop: start=0, step=1, limit=4
    $region2: #{tpu_custom_call.1} parent=1 // loop_pre_header
      _
    $region3: #{tpu_custom_call.1} parent=1 // loop_header
      %s30 = sphi 0, %s34
      %p31 = scmp.ge.s32.totalorder %s30, 4
      %s40 = sphi 0, %s42
      %s43 = sphi 0, %s40
      %s44 = sphi 0, %s43
      %s60 = sphi 0, %s44
      %s66 = sphi 0, %s68
      %s69 = sphi 0, %s66
      %s70 = sphi 0, %s69
      %s86 = sphi 0, %s70
      %s90 = sphi 0, %s90
      %s92 = sphi 0, %s90
      %s93 = sphi 0, %s92
      %s107 = sphi 0, %s93
      %s111 = sphi 0, %s111
      %s113 = sphi 0, %s111
      %s114 = sphi 0, %s113
      %s128 = sphi 0, %s114
      %s132 = sphi 0, %s132
      %s134 = sphi 0, %s132
      %s135 = sphi 0, %s134
      %s149 = sphi 0, %s135
      %s153 = sphi 0, %s153
      %s155 = sphi 0, %s153
      %s156 = sphi 0, %s155
      %s170 = sphi 0, %s156
      %s174 = sphi 0, %s174
      %s176 = sphi 0, %s174
      %s177 = sphi 0, %s176
      %s191 = sphi 0, %s177
      %s195 = sphi 0, %s195
      %s197 = sphi 0, %s195
      %s198 = sphi 0, %s197
      %s212 = sphi 0, %s198
      %s216 = sphi 0, %s216
      %s218 = sphi 0, %s216
      %s219 = sphi 0, %s218
      %s233 = sphi 0, %s219
      %s237 = sphi 0, %s237
      %s239 = sphi 0, %s237
      %s240 = sphi 0, %s239
      %s254 = sphi 0, %s240
      %s258 = sphi 0, %s258
      %s260 = sphi 0, %s258
      %s261 = sphi 0, %s260
      %s275 = sphi 0, %s261
      %s279 = sphi 0, %s279
      %s281 = sphi 0, %s279
      %s282 = sphi 0, %s281
      %s296 = sphi 0, %s282
      %s300 = sphi 0, %s300
      %s302 = sphi 0, %s300
      %s303 = sphi 0, %s302
      %s317 = sphi 0, %s303
      %s321 = sphi 0, %s321
      %s323 = sphi 0, %s321
      %s324 = sphi 0, %s323
      %s338 = sphi 0, %s324
      %s342 = sphi 0, %s342
      %s344 = sphi 0, %s342
      %s345 = sphi 0, %s344
      %s359 = sphi 0, %s345
      %s363 = sphi 0, %s363
      %s365 = sphi 0, %s363
      %s366 = sphi 0, %s365
      %s380 = sphi 0, %s366
      %s386 = sphi 0, %s388
      %s389 = sphi 0, %s386
      %s390 = sphi 0, %s389
      %s406 = sphi 0, %s390
    $region4: #{tpu_custom_call.1} parent=1 // loop_header_branch
      %33 = sbr.rel (%p31) target = $region8
    $region5: #{tpu_custom_call.1} parent=1 // loop_body
      %s35 = ssub.s32 %s30, 1
      %s36 = ssub.s32 %s30, 2
      %s37 = sadd.s32 %s30, 1
      %s38 = ssub.s32 %s30, %s37
      %p39 = scmp.eq.s32.totalorder %s38, 0
      %s41 = sadd.s32 %s40, 1
      %s42 = scalar_select %p39, %s40, %s41
      %p45 = pneg %p39
      %p46 = scmp.eq.s32.totalorder %s30, 1
      %p47 = por %p45, %p46
      %p48 = scmp.ne.s32.totalorder %s40, %s43
      %p49 = scmp.eq.s32.totalorder %s30, 0
      %p50 = por %p48, %p49
      %p51 = scmp.ne.s32.totalorder %s40, %s43
      %p52 = scmp.eq.s32.totalorder %s35, 1
      %p53 = por %p51, %p52
      %p54 = scmp.ne.s32.totalorder %s43, %s44
      %p55 = scmp.eq.s32.totalorder %s35, 0
      %p56 = por %p54, %p55
      %p57 = scmp.ne.s32.totalorder %s43, %s44
      %p58 = scmp.eq.s32.totalorder %s36, 1
      %p59 = por %p57, %p58
      %p61 = scmp.ne.s32.totalorder %s44, %s60
      %p62 = scmp.eq.s32.totalorder %s36, 0
      %p63 = por %p61, %p62
      %s64 = ssub.s32 %s30, %s37
      %p65 = scmp.eq.s32.totalorder %s64, 0
      %s67 = sadd.s32 %s66, 1
      %s68 = scalar_select %p65, %s66, %s67
      %p71 = pneg %p65
      %p72 = scmp.eq.s32.totalorder %s30, 1
      %p73 = por %p71, %p72
      %p74 = scmp.ne.s32.totalorder %s66, %s69
      %p75 = scmp.eq.s32.totalorder %s30, 0
      %p76 = por %p74, %p75
      %p77 = scmp.ne.s32.totalorder %s66, %s69
      %p78 = scmp.eq.s32.totalorder %s35, 1
      %p79 = por %p77, %p78
      %p80 = scmp.ne.s32.totalorder %s69, %s70
      %p81 = scmp.eq.s32.totalorder %s35, 0
      %p82 = por %p80, %p81
      %p83 = scmp.ne.s32.totalorder %s69, %s70
      %p84 = scmp.eq.s32.totalorder %s36, 1
      %p85 = por %p83, %p84
      %p87 = scmp.ne.s32.totalorder %s70, %s86
      %p88 = scmp.eq.s32.totalorder %s36, 0
      %p89 = por %p87, %p88
      %s91 = sadd.s32 %s90, 1
      %p94 = scmp.eq.s32.totalorder %s30, 1
      %p95 = scmp.ne.s32.totalorder %s90, %s92
      %p96 = scmp.eq.s32.totalorder %s30, 0
      %p97 = por %p95, %p96
      %p98 = scmp.ne.s32.totalorder %s90, %s92
      %p99 = scmp.eq.s32.totalorder %s35, 1
      %p100 = por %p98, %p99
      %p101 = scmp.ne.s32.totalorder %s92, %s93
      %p102 = scmp.eq.s32.totalorder %s35, 0
      %p103 = por %p101, %p102
      %p104 = scmp.ne.s32.totalorder %s92, %s93
      %p105 = scmp.eq.s32.totalorder %s36, 1
      %p106 = por %p104, %p105
      %p108 = scmp.ne.s32.totalorder %s93, %s107
      %p109 = scmp.eq.s32.totalorder %s36, 0
      %p110 = por %p108, %p109
      %s112 = sadd.s32 %s111, 1
      %p115 = scmp.eq.s32.totalorder %s30, 1
      %p116 = scmp.ne.s32.totalorder %s111, %s113
      %p117 = scmp.eq.s32.totalorder %s30, 0
      %p118 = por %p116, %p117
      %p119 = scmp.ne.s32.totalorder %s111, %s113
      %p120 = scmp.eq.s32.totalorder %s35, 1
      %p121 = por %p119, %p120
      %p122 = scmp.ne.s32.totalorder %s113, %s114
      %p123 = scmp.eq.s32.totalorder %s35, 0
      %p124 = por %p122, %p123
      %p125 = scmp.ne.s32.totalorder %s113, %s114
      %p126 = scmp.eq.s32.totalorder %s36, 1
      %p127 = por %p125, %p126
      %p129 = scmp.ne.s32.totalorder %s114, %s128
      %p130 = scmp.eq.s32.totalorder %s36, 0
      %p131 = por %p129, %p130
      %s133 = sadd.s32 %s132, 1
      %p136 = scmp.eq.s32.totalorder %s30, 1
      %p137 = scmp.ne.s32.totalorder %s132, %s134
      %p138 = scmp.eq.s32.totalorder %s30, 0
      %p139 = por %p137, %p138
      %p140 = scmp.ne.s32.totalorder %s132, %s134
      %p141 = scmp.eq.s32.totalorder %s35, 1
      %p142 = por %p140, %p141
      %p143 = scmp.ne.s32.totalorder %s134, %s135
      %p144 = scmp.eq.s32.totalorder %s35, 0
      %p145 = por %p143, %p144
      %p146 = scmp.ne.s32.totalorder %s134, %s135
      %p147 = scmp.eq.s32.totalorder %s36, 1
      %p148 = por %p146, %p147
      %p150 = scmp.ne.s32.totalorder %s135, %s149
      %p151 = scmp.eq.s32.totalorder %s36, 0
      %p152 = por %p150, %p151
      %s154 = sadd.s32 %s153, 1
      %p157 = scmp.eq.s32.totalorder %s30, 1
      %p158 = scmp.ne.s32.totalorder %s153, %s155
      %p159 = scmp.eq.s32.totalorder %s30, 0
      %p160 = por %p158, %p159
      %p161 = scmp.ne.s32.totalorder %s153, %s155
      %p162 = scmp.eq.s32.totalorder %s35, 1
      %p163 = por %p161, %p162
      %p164 = scmp.ne.s32.totalorder %s155, %s156
      %p165 = scmp.eq.s32.totalorder %s35, 0
      %p166 = por %p164, %p165
      %p167 = scmp.ne.s32.totalorder %s155, %s156
      %p168 = scmp.eq.s32.totalorder %s36, 1
      %p169 = por %p167, %p168
      %p171 = scmp.ne.s32.totalorder %s156, %s170
      %p172 = scmp.eq.s32.totalorder %s36, 0
      %p173 = por %p171, %p172
      %s175 = sadd.s32 %s174, 1
      %p178 = scmp.eq.s32.totalorder %s30, 1
      %p179 = scmp.ne.s32.totalorder %s174, %s176
      %p180 = scmp.eq.s32.totalorder %s30, 0
      %p181 = por %p179, %p180
      %p182 = scmp.ne.s32.totalorder %s174, %s176
      %p183 = scmp.eq.s32.totalorder %s35, 1
      %p184 = por %p182, %p183
      %p185 = scmp.ne.s32.totalorder %s176, %s177
      %p186 = scmp.eq.s32.totalorder %s35, 0
      %p187 = por %p185, %p186
      %p188 = scmp.ne.s32.totalorder %s176, %s177
      %p189 = scmp.eq.s32.totalorder %s36, 1
      %p190 = por %p188, %p189
      %p192 = scmp.ne.s32.totalorder %s177, %s191
      %p193 = scmp.eq.s32.totalorder %s36, 0
      %p194 = por %p192, %p193
      %s196 = sadd.s32 %s195, 1
      %p199 = scmp.eq.s32.totalorder %s30, 1
      %p200 = scmp.ne.s32.totalorder %s195, %s197
      %p201 = scmp.eq.s32.totalorder %s30, 0
      %p202 = por %p200, %p201
      %p203 = scmp.ne.s32.totalorder %s195, %s197
      %p204 = scmp.eq.s32.totalorder %s35, 1
      %p205 = por %p203, %p204
      %p206 = scmp.ne.s32.totalorder %s197, %s198
      %p207 = scmp.eq.s32.totalorder %s35, 0
      %p208 = por %p206, %p207
      %p209 = scmp.ne.s32.totalorder %s197, %s198
      %p210 = scmp.eq.s32.totalorder %s36, 1
      %p211 = por %p209, %p210
      %p213 = scmp.ne.s32.totalorder %s198, %s212
      %p214 = scmp.eq.s32.totalorder %s36, 0
      %p215 = por %p213, %p214
      %s217 = sadd.s32 %s216, 1
      %p220 = scmp.eq.s32.totalorder %s30, 1
      %p221 = scmp.ne.s32.totalorder %s216, %s218
      %p222 = scmp.eq.s32.totalorder %s30, 0
      %p223 = por %p221, %p222
      %p224 = scmp.ne.s32.totalorder %s216, %s218
      %p225 = scmp.eq.s32.totalorder %s35, 1
      %p226 = por %p224, %p225
      %p227 = scmp.ne.s32.totalorder %s218, %s219
      %p228 = scmp.eq.s32.totalorder %s35, 0
      %p229 = por %p227, %p228
      %p230 = scmp.ne.s32.totalorder %s218, %s219
      %p231 = scmp.eq.s32.totalorder %s36, 1
      %p232 = por %p230, %p231
      %p234 = scmp.ne.s32.totalorder %s219, %s233
      %p235 = scmp.eq.s32.totalorder %s36, 0
      %p236 = por %p234, %p235
      %s238 = sadd.s32 %s237, 1
      %p241 = scmp.eq.s32.totalorder %s30, 1
      %p242 = scmp.ne.s32.totalorder %s237, %s239
      %p243 = scmp.eq.s32.totalorder %s30, 0
      %p244 = por %p242, %p243
      %p245 = scmp.ne.s32.totalorder %s237, %s239
      %p246 = scmp.eq.s32.totalorder %s35, 1
      %p247 = por %p245, %p246
      %p248 = scmp.ne.s32.totalorder %s239, %s240
      %p249 = scmp.eq.s32.totalorder %s35, 0
      %p250 = por %p248, %p249
      %p251 = scmp.ne.s32.totalorder %s239, %s240
      %p252 = scmp.eq.s32.totalorder %s36, 1
      %p253 = por %p251, %p252
      %p255 = scmp.ne.s32.totalorder %s240, %s254
      %p256 = scmp.eq.s32.totalorder %s36, 0
      %p257 = por %p255, %p256
      %s259 = sadd.s32 %s258, 1
      %p262 = scmp.eq.s32.totalorder %s30, 1
      %p263 = scmp.ne.s32.totalorder %s258, %s260
      %p264 = scmp.eq.s32.totalorder %s30, 0
      %p265 = por %p263, %p264
      %p266 = scmp.ne.s32.totalorder %s258, %s260
      %p267 = scmp.eq.s32.totalorder %s35, 1
      %p268 = por %p266, %p267
      %p269 = scmp.ne.s32.totalorder %s260, %s261
      %p270 = scmp.eq.s32.totalorder %s35, 0
      %p271 = por %p269, %p270
      %p272 = scmp.ne.s32.totalorder %s260, %s261
      %p273 = scmp.eq.s32.totalorder %s36, 1
      %p274 = por %p272, %p273
      %p276 = scmp.ne.s32.totalorder %s261, %s275
      %p277 = scmp.eq.s32.totalorder %s36, 0
      %p278 = por %p276, %p277
      %s280 = sadd.s32 %s279, 1
      %p283 = scmp.eq.s32.totalorder %s30, 1
      %p284 = scmp.ne.s32.totalorder %s279, %s281
      %p285 = scmp.eq.s32.totalorder %s30, 0
      %p286 = por %p284, %p285
      %p287 = scmp.ne.s32.totalorder %s279, %s281
      %p288 = scmp.eq.s32.totalorder %s35, 1
      %p289 = por %p287, %p288
      %p290 = scmp.ne.s32.totalorder %s281, %s282
      %p291 = scmp.eq.s32.totalorder %s35, 0
      %p292 = por %p290, %p291
      %p293 = scmp.ne.s32.totalorder %s281, %s282
      %p294 = scmp.eq.s32.totalorder %s36, 1
      %p295 = por %p293, %p294
      %p297 = scmp.ne.s32.totalorder %s282, %s296
      %p298 = scmp.eq.s32.totalorder %s36, 0
      %p299 = por %p297, %p298
      %s301 = sadd.s32 %s300, 1
      %p304 = scmp.eq.s32.totalorder %s30, 1
      %p305 = scmp.ne.s32.totalorder %s300, %s302
      %p306 = scmp.eq.s32.totalorder %s30, 0
      %p307 = por %p305, %p306
      %p308 = scmp.ne.s32.totalorder %s300, %s302
      %p309 = scmp.eq.s32.totalorder %s35, 1
      %p310 = por %p308, %p309
      %p311 = scmp.ne.s32.totalorder %s302, %s303
      %p312 = scmp.eq.s32.totalorder %s35, 0
      %p313 = por %p311, %p312
      %p314 = scmp.ne.s32.totalorder %s302, %s303
      %p315 = scmp.eq.s32.totalorder %s36, 1
      %p316 = por %p314, %p315
      %p318 = scmp.ne.s32.totalorder %s303, %s317
      %p319 = scmp.eq.s32.totalorder %s36, 0
      %p320 = por %p318, %p319
      %s322 = sadd.s32 %s321, 1
      %p325 = scmp.eq.s32.totalorder %s30, 1
      %p326 = scmp.ne.s32.totalorder %s321, %s323
      %p327 = scmp.eq.s32.totalorder %s30, 0
      %p328 = por %p326, %p327
      %p329 = scmp.ne.s32.totalorder %s321, %s323
      %p330 = scmp.eq.s32.totalorder %s35, 1
      %p331 = por %p329, %p330
      %p332 = scmp.ne.s32.totalorder %s323, %s324
      %p333 = scmp.eq.s32.totalorder %s35, 0
      %p334 = por %p332, %p333
      %p335 = scmp.ne.s32.totalorder %s323, %s324
      %p336 = scmp.eq.s32.totalorder %s36, 1
      %p337 = por %p335, %p336
      %p339 = scmp.ne.s32.totalorder %s324, %s338
      %p340 = scmp.eq.s32.totalorder %s36, 0
      %p341 = por %p339, %p340
      %s343 = sadd.s32 %s342, 1
      %p346 = scmp.eq.s32.totalorder %s30, 1
      %p347 = scmp.ne.s32.totalorder %s342, %s344
      %p348 = scmp.eq.s32.totalorder %s30, 0
      %p349 = por %p347, %p348
      %p350 = scmp.ne.s32.totalorder %s342, %s344
      %p351 = scmp.eq.s32.totalorder %s35, 1
      %p352 = por %p350, %p351
      %p353 = scmp.ne.s32.totalorder %s344, %s345
      %p354 = scmp.eq.s32.totalorder %s35, 0
      %p355 = por %p353, %p354
      %p356 = scmp.ne.s32.totalorder %s344, %s345
      %p357 = scmp.eq.s32.totalorder %s36, 1
      %p358 = por %p356, %p357
      %p360 = scmp.ne.s32.totalorder %s345, %s359
      %p361 = scmp.eq.s32.totalorder %s36, 0
      %p362 = por %p360, %p361
      %s364 = sadd.s32 %s363, 1
      %p367 = scmp.eq.s32.totalorder %s30, 1
      %p368 = scmp.ne.s32.totalorder %s363, %s365
      %p369 = scmp.eq.s32.totalorder %s30, 0
      %p370 = por %p368, %p369
      %p371 = scmp.ne.s32.totalorder %s363, %s365
      %p372 = scmp.eq.s32.totalorder %s35, 1
      %p373 = por %p371, %p372
      %p374 = scmp.ne.s32.totalorder %s365, %s366
      %p375 = scmp.eq.s32.totalorder %s35, 0
      %p376 = por %p374, %p375
      %p377 = scmp.ne.s32.totalorder %s365, %s366
      %p378 = scmp.eq.s32.totalorder %s36, 1
      %p379 = por %p377, %p378
      %p381 = scmp.ne.s32.totalorder %s366, %s380
      %p382 = scmp.eq.s32.totalorder %s36, 0
      %p383 = por %p381, %p382
      %s384 = ssub.s32 %s30, %s37
      %p385 = scmp.eq.s32.totalorder %s384, 0
      %s387 = sadd.s32 %s386, 1
      %s388 = scalar_select %p385, %s386, %s387
      %p391 = pneg %p385
      %p392 = scmp.eq.s32.totalorder %s30, 1
      %p393 = por %p391, %p392
      %p394 = scmp.ne.s32.totalorder %s386, %s389
      %p395 = scmp.eq.s32.totalorder %s30, 0
      %p396 = por %p394, %p395
      %p397 = scmp.ne.s32.totalorder %s386, %s389
      %p398 = scmp.eq.s32.totalorder %s35, 1
      %p399 = por %p397, %p398
      %p400 = scmp.ne.s32.totalorder %s389, %s390
      %p401 = scmp.eq.s32.totalorder %s35, 0
      %p402 = por %p400, %p401
      %p403 = scmp.ne.s32.totalorder %s389, %s390
      %p404 = scmp.eq.s32.totalorder %s36, 1
      %p405 = por %p403, %p404
      %p407 = scmp.ne.s32.totalorder %s390, %s406
      %p408 = scmp.eq.s32.totalorder %s36, 0
      %p409 = por %p407, %p408
      %p410 = scmp.le.s32.totalorder 1, %s30
      %p411 = scmp.lt.s32.totalorder %s30, 3
      %p412 = pnand %p410, %p411
      %p413 = pneg %p412
      // Predicated region
      $region9: #{tpu_custom_call.1} parent=5 // pred_check
        _
      $region10: #{tpu_custom_call.1} parent=5 // pred_check_branch
        %415 = sbr.rel (%p412) target = $region12
      $region11: #{tpu_custom_call.1} parent=5 // pred_region
        %s416 = ssub.s32 %s30, 1
        // Predicated region
        $region13: #{tpu_custom_call.1} parent=11 // pred_check
          %p417 = pneg %p103
        $region14: #{tpu_custom_call.1} parent=11 // pred_check_branch
          %419 = sbr.rel (%p417) target = $region16
        $region15: #{tpu_custom_call.1} parent=11 // pred_region
          _
        $region16: #{tpu_custom_call.1} parent=11 // pred_fallthru
          _
        // Predicated region
        $region17: #{tpu_custom_call.1} parent=11 // pred_check
          %p420 = pneg %p124
        $region18: #{tpu_custom_call.1} parent=11 // pred_check_branch
          %422 = sbr.rel (%p420) target = $region20
        $region19: #{tpu_custom_call.1} parent=11 // pred_region
          _
        $region20: #{tpu_custom_call.1} parent=11 // pred_fallthru
          _
        // Predicated region
        $region21: #{tpu_custom_call.1} parent=11 // pred_check
          %p423 = pneg %p145
        $region22: #{tpu_custom_call.1} parent=11 // pred_check_branch
          %425 = sbr.rel (%p423) target = $region24
        $region23: #{tpu_custom_call.1} parent=11 // pred_region
          %427 = vsyncadd [#allocation6], 0
          %s428 = sshll.u32 %s4, 4
          %s429 = int_to_ptr.hbm [resolvable:$true] %s428
          %s430 = sshll.u32 [#allocation5], 4
          %s431 = int_to_ptr.vmem [resolvable:$true] %s430
          %436 = dma.hbm_to_vmem [thread:$0]  %s429, 256, %s431, [#allocation6], 64, 64, 4
        $region24: #{tpu_custom_call.1} parent=11 // pred_fallthru
          _
        // Predicated region
        $region25: #{tpu_custom_call.1} parent=11 // pred_check
          %p437 = pneg %p166
        $region26: #{tpu_custom_call.1} parent=11 // pred_check_branch
          %439 = sbr.rel (%p437) target = $region28
        $region27: #{tpu_custom_call.1} parent=11 // pred_region
          _
        $region28: #{tpu_custom_call.1} parent=11 // pred_fallthru
          _
        // Predicated region
        $region29: #{tpu_custom_call.1} parent=11 // pred_check
          %p440 = pneg %p187
        $region30: #{tpu_custom_call.1} parent=11 // pred_check_branch
          %442 = sbr.rel (%p440) target = $region32
        $region31: #{tpu_custom_call.1} parent=11 // pred_region
          %444 = vsyncadd [#allocation6], 0
          %s445 = sshll.u32 %s6, 4
          %s446 = int_to_ptr.hbm [resolvable:$true] %s445
          %s447 = sshll.u32 [#allocation7], 4
          %s448 = int_to_ptr.vmem [resolvable:$true] %s447
          %453 = dma.hbm_to_vmem [thread:$0]  %s446, 256, %s448, [#allocation6], 64, 64, 4
        $region32: #{tpu_custom_call.1} parent=11 // pred_fallthru
          _
        // Predicated region
        $region33: #{tpu_custom_call.1} parent=11 // pred_check
          %p454 = pneg %p208
        $region34: #{tpu_custom_call.1} parent=11 // pred_check_branch
          %456 = sbr.rel (%p454) target = $region36
        $region35: #{tpu_custom_call.1} parent=11 // pred_region
          _
        $region36: #{tpu_custom_call.1} parent=11 // pred_fallthru
          _
        // Predicated region
        $region37: #{tpu_custom_call.1} parent=11 // pred_check
          %p457 = pneg %p229
        $region38: #{tpu_custom_call.1} parent=11 // pred_check_branch
          %459 = sbr.rel (%p457) target = $region40
        $region39: #{tpu_custom_call.1} parent=11 // pred_region
          _
        $region40: #{tpu_custom_call.1} parent=11 // pred_fallthru
          _
        // Predicated region
        $region41: #{tpu_custom_call.1} parent=11 // pred_check
          %p460 = pneg %p250
        $region42: #{tpu_custom_call.1} parent=11 // pred_check_branch
          %462 = sbr.rel (%p460) target = $region44
        $region43: #{tpu_custom_call.1} parent=11 // pred_region
          _
        $region44: #{tpu_custom_call.1} parent=11 // pred_fallthru
          _
        // Predicated region
        $region45: #{tpu_custom_call.1} parent=11 // pred_check
          %p463 = pneg %p271
        $region46: #{tpu_custom_call.1} parent=11 // pred_check_branch
          %465 = sbr.rel (%p463) target = $region48
        $region47: #{tpu_custom_call.1} parent=11 // pred_region
          %467 = vsyncadd [#allocation9], 0
          %s468 = sshll.u32 %s10, 4
          %s469 = int_to_ptr.hbm [resolvable:$true] %s468
          %s470 = sshll.u32 [#allocation8], 4
          %s471 = int_to_ptr.vmem [resolvable:$true] %s470
          %476 = dma.hbm_to_vmem [thread:$0]  %s469, 256, %s471, [#allocation9], 64, 64, 4
        $region48: #{tpu_custom_call.1} parent=11 // pred_fallthru
          _
        // Predicated region
        $region49: #{tpu_custom_call.1} parent=11 // pred_check
          %p477 = pneg %p292
        $region50: #{tpu_custom_call.1} parent=11 // pred_check_branch
          %479 = sbr.rel (%p477) target = $region52
        $region51: #{tpu_custom_call.1} parent=11 // pred_region
          _
        $region52: #{tpu_custom_call.1} parent=11 // pred_fallthru
          _
        // Predicated region
        $region53: #{tpu_custom_call.1} parent=11 // pred_check
          %p480 = pneg %p313
        $region54: #{tpu_custom_call.1} parent=11 // pred_check_branch
          %482 = sbr.rel (%p480) target = $region56
        $region55: #{tpu_custom_call.1} parent=11 // pred_region
          _
        $region56: #{tpu_custom_call.1} parent=11 // pred_fallthru
          _
        // Predicated region
        $region57: #{tpu_custom_call.1} parent=11 // pred_check
          %p483 = pneg %p334
        $region58: #{tpu_custom_call.1} parent=11 // pred_check_branch
          %485 = sbr.rel (%p483) target = $region60
        $region59: #{tpu_custom_call.1} parent=11 // pred_region
          _
        $region60: #{tpu_custom_call.1} parent=11 // pred_fallthru
          _
        // Predicated region
        $region61: #{tpu_custom_call.1} parent=11 // pred_check
          %p486 = pneg %p355
        $region62: #{tpu_custom_call.1} parent=11 // pred_check_branch
          %488 = sbr.rel (%p486) target = $region64
        $region63: #{tpu_custom_call.1} parent=11 // pred_region
          _
        $region64: #{tpu_custom_call.1} parent=11 // pred_fallthru
          _
        // Predicated region
        $region65: #{tpu_custom_call.1} parent=11 // pred_check
          %p489 = pneg %p376
        $region66: #{tpu_custom_call.1} parent=11 // pred_check_branch
          %491 = sbr.rel (%p489) target = $region68
        $region67: #{tpu_custom_call.1} parent=11 // pred_region
          _
        $region68: #{tpu_custom_call.1} parent=11 // pred_fallthru
          _
      $region12: #{tpu_custom_call.1} parent=5 // pred_fallthru
        _
      %p492 = scmp.lt.s32.totalorder %s30, 2
      // Predicated region
      $region69: #{tpu_custom_call.1} parent=5 // pred_check
        %p493 = pneg %p492
      $region70: #{tpu_custom_call.1} parent=5 // pred_check_branch
        %495 = sbr.rel (%p493) target = $region72
      $region71: #{tpu_custom_call.1} parent=5 // pred_region
        // Predicated region
        $region73: #{tpu_custom_call.1} parent=71 // pred_check
          %p496 = pneg %p50
        $region74: #{tpu_custom_call.1} parent=71 // pred_check_branch
          %498 = sbr.rel (%p496) target = $region76
        $region75: #{tpu_custom_call.1} parent=71 // pred_region
          %s499 = smul.u32 2, %s30
          %p500 = scmp.lt.s32.totalorder %s499, 3
          %s501 = scalar_select %p500, %s499, 3
          %s502 = smul.addr %s501, 8
          %s503 = scalar_lea.vmem %s0, %s502
          %s504 = smul.u32 2, %s30
        $region76: #{tpu_custom_call.1} parent=71 // pred_fallthru
          _
        // Predicated region
        $region77: #{tpu_custom_call.1} parent=71 // pred_check
          %p505 = pneg %p76
        $region78: #{tpu_custom_call.1} parent=71 // pred_check_branch
          %507 = sbr.rel (%p505) target = $region80
        $region79: #{tpu_custom_call.1} parent=71 // pred_region
          %s508 = sand.u32 %s66, 1
          %s509 = scalar_lea.sflag [#allocation3], %s508
          %s510 = sand.u32 %s66, 1
          %s511 = smul.addr %s510, 16
          %s512 = scalar_lea.vmem [#allocation2], %s511
          %s513 = smul.u32 2, %s30
          %515 = vsyncadd %s509, 0
          %s516 = smul.addr %s513, 8
          %s517 = scalar_lea.hbm %s1, %s516
          %s518 = sshll.u32 %s517, 4
          %s519 = int_to_ptr.hbm [resolvable:$true] %s518
          %s520 = sshll.u32 %s512, 4
          %s521 = int_to_ptr.vmem [resolvable:$true] %s520
          %526 = dma.hbm_to_vmem [thread:$0]  %s519, 256, %s521, %s509, 128, 128, 8
        $region80: #{tpu_custom_call.1} parent=71 // pred_fallthru
          _
      $region72: #{tpu_custom_call.1} parent=5 // pred_fallthru
        _
      %p527 = scmp.le.s32.totalorder 1, %s30
      %p528 = scmp.lt.s32.totalorder %s30, 3
      %p529 = pnand %p527, %p528
      %p530 = pneg %p529
      // Predicated region
      $region81: #{tpu_custom_call.1} parent=5 // pred_check
        _
      $region82: #{tpu_custom_call.1} parent=5 // pred_check_branch
        %532 = sbr.rel (%p529) target = $region84
      $region83: #{tpu_custom_call.1} parent=5 // pred_region
        %s533 = ssub.s32 %s30, 1
        %s534 = sand.u32 %s69, 1
        %s535 = scalar_lea.sflag [#allocation3], %s534
        %s536 = sand.u32 %s69, 1
        %s537 = smul.addr %s536, 16
        %s538 = scalar_lea.vmem [#allocation2], %s537
        // Predicated region
        $region85: #{tpu_custom_call.1} parent=83 // pred_check
          %p539 = pneg %p82
        $region86: #{tpu_custom_call.1} parent=83 // pred_check_branch
          %541 = sbr.rel (%p539) target = $region88
        $region87: #{tpu_custom_call.1} parent=83 // pred_region
          %543 = dma.done %s535, 256
        $region88: #{tpu_custom_call.1} parent=83 // pred_fallthru
          _
        // Predicated region
        $region89: #{tpu_custom_call.1} parent=83 // pred_check
          %p544 = pneg %p145
        $region90: #{tpu_custom_call.1} parent=83 // pred_check_branch
          %546 = sbr.rel (%p544) target = $region92
        $region91: #{tpu_custom_call.1} parent=83 // pred_region
          %548 = dma.done [#allocation6], 256
        $region92: #{tpu_custom_call.1} parent=83 // pred_fallthru
          _
        // Predicated region
        $region93: #{tpu_custom_call.1} parent=83 // pred_check
          %p549 = pneg %p187
        $region94: #{tpu_custom_call.1} parent=83 // pred_check_branch
          %551 = sbr.rel (%p549) target = $region96
        $region95: #{tpu_custom_call.1} parent=83 // pred_region
          %553 = dma.done [#allocation6], 256
        $region96: #{tpu_custom_call.1} parent=83 // pred_fallthru
          _
        // Predicated region
        $region97: #{tpu_custom_call.1} parent=83 // pred_check
          %p554 = pneg %p271
        $region98: #{tpu_custom_call.1} parent=83 // pred_check_branch
          %556 = sbr.rel (%p554) target = $region100
        $region99: #{tpu_custom_call.1} parent=83 // pred_region
          %558 = dma.done [#allocation9], 256
        $region100: #{tpu_custom_call.1} parent=83 // pred_fallthru
          _
        %s559 = smul.u32 2, %s35
        %p560 = scmp.lt.s32.totalorder %s559, 3
        %s561 = scalar_select %p560, %s559, 3
        %s562 = smul.addr %s561, 8
        %s563 = scalar_lea.vmem %s0, %s562
        %p564 = pneg %p56
        %p565 = pneg %p53
        %s566 = sand.u32 %s69, 1
        %s567 = scalar_lea.sflag [#allocation3], %s566
        %s568 = sand.u32 %s69, 1
        %s569 = smul.addr %s568, 16
        %s570 = scalar_lea.vmem [#allocation2], %s569
        %p571 = pneg %p82
        %p572 = pneg %p79
        %p573 = pneg %p103
        %p574 = pneg %p100
        %p575 = pneg %p124
        %p576 = pneg %p121
        %p577 = pneg %p145
        %p578 = pneg %p142
        %p579 = pneg %p166
        %p580 = pneg %p163
        %p581 = pneg %p187
        %p582 = pneg %p184
        %p583 = pneg %p208
        %p584 = pneg %p205
        %p585 = pneg %p229
        %p586 = pneg %p226
        %p587 = pneg %p250
        %p588 = pneg %p247
        %p589 = pneg %p271
        %p590 = pneg %p268
        %p591 = pneg %p292
        %p592 = pneg %p289
        %p593 = pneg %p313
        %p594 = pneg %p310
        %p595 = pneg %p334
        %p596 = pneg %p331
        %p597 = pneg %p355
        %p598 = pneg %p352
        %p599 = pneg %p376
        %p600 = pneg %p373
        %p601 = pneg %p402
        %p602 = pneg %p399
        %s603 = sand.u32 %s389, 1
        %s604 = scalar_lea.sflag [#allocation4], %s603
        %s605 = sand.u32 %s389, 1
        %s606 = smul.addr %s605, 16
        %s607 = scalar_lea.vmem [#allocation10], %s606
        %s608 = smul.u32 2, %s35
        %p609 = scmp.lt.s32.totalorder %s608, 3
        %s610 = scalar_select %p609, %s608, 3
        %s611 = smul.addr %s610, 8
        %s612 = scalar_lea.vmem %s0, %s611
        %s613 = smul.u32 2, %s35
        %s614 = smul.u32 2, %s35
        %s615 = smul.u32 2, %s35
        %v617 = vld [vmem:[%s2] sm:$0xf]
        %v618 = vld [vmem:[%s2 + $0x4] sm:$0xf]
        %v619 = vld [vmem:[%s2 + $0x8] sm:$0xf]
        %v620 = vld [vmem:[%s2 + $0xc] sm:$0xf]
        %v621 = vld [vmem:[#allocation5] sm:$0xf]
        %v622 = vld [vmem:[#allocation5 + $0x4] sm:$0xf]
        %v623 = vld [vmem:[#allocation5 + $0x8] sm:$0xf]
        %v624 = vld [vmem:[#allocation5 + $0xc] sm:$0xf]
        %v625 = vld [vmem:[#allocation8] sm:$0xf]
        %v626 = vld [vmem:[#allocation8 + $0x4] sm:$0xf]
        %v627 = vld [vmem:[#allocation8 + $0x8] sm:$0xf]
        %v628 = vld [vmem:[#allocation8 + $0xc] sm:$0xf]
        %v629 = vld [vmem:[%s12] sm:$0xf]
        %v630 = vld [vmem:[%s12 + $0x4] sm:$0xf]
        %v631 = vld [vmem:[%s12 + $0x8] sm:$0xf]
        %v632 = vld [vmem:[%s12 + $0xc] sm:$0xf]
        %v633 = vld [vmem:[%s12 + $0x10] sm:$0xf]
        %v634 = vld [vmem:[%s12 + $0x14] sm:$0xf]
        %v635 = vld [vmem:[%s12 + $0x18] sm:$0xf]
        %v636 = vld [vmem:[%s12 + $0x1c] sm:$0xf]
        %v637 = vld [vmem:[%s3] sm:$0x1]
        %v638 = vld [vmem:[%s5] sm:$0x1]
        %v639 = vld [vmem:[%s7] sm:$0x1]
        %v640 = vld [vmem:[%s11] sm:$0x1]
        %v641 = vld [vmem:[%s13] sm:$0x1]
        %v642 = vld [vmem:[%s8] sm:$0x1]
        %v643 = vld [vmem:[%s9] sm:$0x1]
        %v644 = vld [vmem:[%s14] sm:$0x1]
        %v645 = vld [vmem:[%s15] sm:$0x1]
        %v646 = vld [vmem:[%s612] sm:$0xff]
        %v647 = vld [vmem:[%s538] sm:$0xff]
        %v648 = vadd.f32 %v646, %v647
        %v649 = vpack.c.bf16 %v648, %v648
        %v651 = vperm.slane %v637, 0
        %v657 = vunpack.c.l.b16 %v617
        %v658 = vunpack.c.l.b16 %v618
        %v659 = vunpack.c.l.b16 %v619
        %v660 = vunpack.c.l.b16 %v620
        %v661 = vpack.c.b16 %v658, %v657
        %v662 = vpack.c.b16 %v660, %v659
        %vm665 = vcmask 261120
        %v667 = vsel %vm665, %v649, 0
        %669 = vmatpush.bf16.msra.mxu0 0
        %670 = vmatpush.bf16.msra.mxu0 0
        %671 = vmatpush.bf16.msra.mxu0 0
        %672 = vmatpush.bf16.msra.mxu0 0
        %673 = vmatpush.bf16.msra.mxu0 0
        %674 = vmatpush.bf16.msra.mxu0 0
        %675 = vmatpush.bf16.msra.mxu0 %v662
        %676 = vmatpush.bf16.msra.mxu0 %v661
        %677 = vmatmul.bf16.gmra.mxu0 %v667
        %v678 = vpop.f32.mrf.mxu0
        %v679 = vadd.f32 %v651, %v678
        %v680 = vpop.f32.mrf.mxu0
        %681 = vdwg.mxu0
        %v682 = vpack.c.bf16 %v646, %v646
        %v684 = vperm.slane %v638, 0
        %v690 = vunpack.c.l.b16 %v621
        %v691 = vunpack.c.l.b16 %v622
        %v692 = vunpack.c.l.b16 %v623
        %v693 = vunpack.c.l.b16 %v624
        %v694 = vpack.c.b16 %v691, %v690
        %v695 = vpack.c.b16 %v693, %v692
        %v699 = vsel %vm665, %v682, 0
        %701 = vmatpush.bf16.msra.mxu0 0
        %702 = vmatpush.bf16.msra.mxu0 0
        %703 = vmatpush.bf16.msra.mxu0 0
        %704 = vmatpush.bf16.msra.mxu0 0
        %705 = vmatpush.bf16.msra.mxu0 0
        %706 = vmatpush.bf16.msra.mxu0 0
        %707 = vmatpush.bf16.msra.mxu0 %v695
        %708 = vmatpush.bf16.msra.mxu0 %v694
        %709 = vmatmul.bf16.gmra.mxu0 %v699
        %v710 = vpop.f32.mrf.mxu0
        %v711 = vadd.f32 %v684, %v710
        %v712 = vpop.f32.mrf.mxu0
        %713 = vdwg.mxu0
        %v714 = vmul.f32 %v679, 0.35355338
        %v715 = vpack.c.bf16 %v714, %v714
        %v716 = vpack.c.bf16 %v679, %v679
        %v717 = vpack.c.bf16 %v711, %v711
        %719 = vrot.lane.b32.xlu0 %v716, 96
        %v720 = vpop.permute.xlu0 %719
        %vm721 = vcmask 64512
        %v723 = vsel %vm721, %v715, 0
        %v726 = vsel %vm721, %v720, 0
        %728 = vmatpush.bf16.xpose.msra.mxu0 0
        %729 = vmatpush.bf16.xpose.msra.mxu0 0
        %730 = vmatpush.bf16.xpose.msra.mxu0 0
        %731 = vmatpush.bf16.xpose.msra.mxu0 0
        %732 = vmatpush.bf16.xpose.msra.mxu0 0
        %733 = vmatpush.bf16.xpose.msra.mxu0 0
        %734 = vmatpush.bf16.xpose.msra.mxu0 0
        %735 = vmatpush.bf16.xpose.msra.mxu0 %v726
        %736 = vmatmul.bf16.gmra.mxu0 %v723
        %v737 = vpop.f32.mrf.mxu0
        %v738 = vadd.f32 0.0, %v737
        %v739 = vpop.f32.mrf.mxu0
        %740 = vdwg.mxu0
        %v741 = vsel %vm721, %v738, -inf
        %742 = vmax.xlane.f32.xlu0 %v741
        %v743 = vpop.xlane.xlu0 %742
        %v744 = vsub.f32 %v738, %v743
        %v745 = vmul.f32 %v744, 1.442695
        %v746 = vpow.pop %v745
        %v747 = vsel %vm721, %v746, 0.0
        %748 = vadd.xlane.f32.xlu0 %v747
        %v749 = vpop.xlane.xlu0 %748
        %v750 = vrcp.pop %v749
        %v751 = vmul.f32 %v746, %v750
        %v752 = vpack.c.bf16 %v751, %v751
        %v754 = vsel %vm721, %v752, 0
        %vm756 = vcmask 1043456
        %v758 = vsel %vm756, %v717, 0
        %760 = vmatpush.bf16.msra.mxu0 0
        %761 = vmatpush.bf16.msra.mxu0 0
        %762 = vmatpush.bf16.msra.mxu0 0
        %763 = vmatpush.bf16.msra.mxu0 0
        %764 = vmatpush.bf16.msra.mxu0 0
        %765 = vmatpush.bf16.msra.mxu0 0
        %766 = vmatpush.bf16.msra.mxu0 0
        %767 = vmatpush.bf16.msra.mxu0 %v758
        %768 = vmatmul.bf16.gmra.mxu0 %v754
        %v769 = vpop.f32.mrf.mxu0
        %v770 = vadd.f32 0.0, %v769
        %v771 = vpop.f32.mrf.mxu0
        %772 = vdwg.mxu0
        %v773 = vpack.c.bf16 %v770, %v770
        %v774 = vld [vmem:[#allocation7] sm:$0xf]
        %776 = vrot.lane.b32.xlu0 %v715, 120
        %v777 = vpop.permute.xlu0 %776
        %778 = vrot.lane.b32.xlu0 %v716, 88
        %v779 = vpop.permute.xlu0 %778
        %v781 = vsel %vm721, %v777, 0
        %v784 = vsel %vm721, %v779, 0
        %786 = vmatpush.bf16.xpose.msra.mxu0 0
        %787 = vmatpush.bf16.xpose.msra.mxu0 0
        %788 = vmatpush.bf16.xpose.msra.mxu0 0
        %789 = vmatpush.bf16.xpose.msra.mxu0 0
        %790 = vmatpush.bf16.xpose.msra.mxu0 0
        %791 = vmatpush.bf16.xpose.msra.mxu0 0
        %792 = vmatpush.bf16.xpose.msra.mxu0 0
        %793 = vmatpush.bf16.xpose.msra.mxu0 %v784
        %794 = vmatmul.bf16.gmra.mxu0 %v781
        %v795 = vpop.f32.mrf.mxu0
        %v796 = vadd.f32 0.0, %v795
        %v797 = vpop.f32.mrf.mxu0
        %798 = vdwg.mxu0
        %v799 = vsel %vm721, %v796, -inf
        %800 = vmax.xlane.f32.xlu0 %v799
        %v801 = vpop.xlane.xlu0 %800
        %v802 = vsub.f32 %v796, %v801
        %v803 = vmul.f32 %v802, 1.442695
        %v804 = vpow.pop %v803
        %v805 = vsel %vm721, %v804, 0.0
        %806 = vadd.xlane.f32.xlu0 %v805
        %v807 = vpop.xlane.xlu0 %806
        %v808 = vrcp.pop %v807
        %v809 = vmul.f32 %v804, %v808
        %v810 = vpack.c.bf16 %v809, %v809
        %812 = vrot.lane.b32.xlu0 %v717, 120
        %v813 = vpop.permute.xlu0 %812
        %v815 = vsel %vm721, %v810, 0
        %v818 = vsel %vm756, %v813, 0
        %820 = vmatpush.bf16.msra.mxu0 0
        %821 = vmatpush.bf16.msra.mxu0 0
        %822 = vmatpush.bf16.msra.mxu0 0
        %823 = vmatpush.bf16.msra.mxu0 0
        %824 = vmatpush.bf16.msra.mxu0 0
        %825 = vmatpush.bf16.msra.mxu0 0
        %826 = vmatpush.bf16.msra.mxu0 0
        %827 = vmatpush.bf16.msra.mxu0 %v818
        %828 = vmatmul.bf16.gmra.mxu0 %v815
        %v829 = vpop.f32.mrf.mxu0
        %v830 = vadd.f32 0.0, %v829
        %v831 = vpop.f32.mrf.mxu0
        %832 = vdwg.mxu0
        %v833 = vpack.c.bf16 %v830, %v830
        %s834 = scalar_lea.vmem [#allocation7], 4
        %v835 = vld [vmem:[%s834] sm:$0xf]
        %v837 = vsel %vm721, %v833, 0
        %v840 = vsel %vm756, %v835, 0
        %842 = vmatpush.bf16.msra.mxu0 0
        %843 = vmatpush.bf16.msra.mxu0 0
        %844 = vmatpush.bf16.msra.mxu0 0
        %845 = vmatpush.bf16.msra.mxu0 0
        %846 = vmatpush.bf16.msra.mxu0 0
        %847 = vmatpush.bf16.msra.mxu0 0
        %848 = vmatpush.bf16.msra.mxu0 0
        %849 = vmatpush.bf16.msra.mxu0 %v840
        %850 = vmatmul.bf16.gmra.mxu0 %v837
        %v851 = vpop.f32.mrf.mxu0
        %v852 = vadd.f32 0.0, %v851
        %v853 = vpop.f32.mrf.mxu0
        %854 = vdwg.mxu0
        %v856 = vsel %vm721, %v773, 0
        %v859 = vsel %vm756, %v774, 0
        %861 = vmatpush.bf16.msra.mxu0 0
        %862 = vmatpush.bf16.msra.mxu0 0
        %863 = vmatpush.bf16.msra.mxu0 0
        %864 = vmatpush.bf16.msra.mxu0 0
        %865 = vmatpush.bf16.msra.mxu0 0
        %866 = vmatpush.bf16.msra.mxu0 0
        %867 = vmatpush.bf16.msra.mxu0 0
        %868 = vmatpush.bf16.msra.mxu0 %v859
        %869 = vmatmul.bf16.gmra.mxu0 %v856
        %v870 = vpop.f32.mrf.mxu0
        %v871 = vadd.f32 %v852, %v870
        %v872 = vpop.f32.mrf.mxu0
        %873 = vdwg.mxu0
        %874 = vrot.lane.b32.xlu0 %v715, 112
        %v875 = vpop.permute.xlu0 %874
        %876 = vrot.lane.b32.xlu0 %v716, 80
        %v877 = vpop.permute.xlu0 %876
        %v879 = vsel %vm721, %v875, 0
        %v882 = vsel %vm721, %v877, 0
        %884 = vmatpush.bf16.xpose.msra.mxu0 0
        %885 = vmatpush.bf16.xpose.msra.mxu0 0
        %886 = vmatpush.bf16.xpose.msra.mxu0 0
        %887 = vmatpush.bf16.xpose.msra.mxu0 0
        %888 = vmatpush.bf16.xpose.msra.mxu0 0
        %889 = vmatpush.bf16.xpose.msra.mxu0 0
        %890 = vmatpush.bf16.xpose.msra.mxu0 0
        %891 = vmatpush.bf16.xpose.msra.mxu0 %v882
        %892 = vmatmul.bf16.gmra.mxu0 %v879
        %v893 = vpop.f32.mrf.mxu0
        %v894 = vadd.f32 0.0, %v893
        %v895 = vpop.f32.mrf.mxu0
        %896 = vdwg.mxu0
        %v897 = vsel %vm721, %v894, -inf
        %898 = vmax.xlane.f32.xlu0 %v897
        %v899 = vpop.xlane.xlu0 %898
        %v900 = vsub.f32 %v894, %v899
        %v901 = vmul.f32 %v900, 1.442695
        %v902 = vpow.pop %v901
        %v903 = vsel %vm721, %v902, 0.0
        %904 = vadd.xlane.f32.xlu0 %v903
        %v905 = vpop.xlane.xlu0 %904
        %v906 = vrcp.pop %v905
        %v907 = vmul.f32 %v902, %v906
        %v908 = vpack.c.bf16 %v907, %v907
        %909 = vrot.lane.b32.xlu0 %v717, 112
        %v910 = vpop.permute.xlu0 %909
        %v912 = vsel %vm721, %v908, 0
        %v915 = vsel %vm756, %v910, 0
        %917 = vmatpush.bf16.msra.mxu0 0
        %918 = vmatpush.bf16.msra.mxu0 0
        %919 = vmatpush.bf16.msra.mxu0 0
        %920 = vmatpush.bf16.msra.mxu0 0
        %921 = vmatpush.bf16.msra.mxu0 0
        %922 = vmatpush.bf16.msra.mxu0 0
        %923 = vmatpush.bf16.msra.mxu0 0
        %924 = vmatpush.bf16.msra.mxu0 %v915
        %925 = vmatmul.bf16.gmra.mxu0 %v912
        %v926 = vpop.f32.mrf.mxu0
        %v927 = vadd.f32 0.0, %v926
        %v928 = vpop.f32.mrf.mxu0
        %929 = vdwg.mxu0
        %v930 = vpack.c.bf16 %v927, %v927
        %s931 = scalar_lea.vmem [#allocation7], 8
        %v932 = vld [vmem:[%s931] sm:$0xf]
        %v934 = vsel %vm721, %v930, 0
        %v937 = vsel %vm756, %v932, 0
        %939 = vmatpush.bf16.msra.mxu0 0
        %940 = vmatpush.bf16.msra.mxu0 0
        %941 = vmatpush.bf16.msra.mxu0 0
        %942 = vmatpush.bf16.msra.mxu0 0
        %943 = vmatpush.bf16.msra.mxu0 0
        %944 = vmatpush.bf16.msra.mxu0 0
        %945 = vmatpush.bf16.msra.mxu0 0
        %946 = vmatpush.bf16.msra.mxu0 %v937
        %947 = vmatmul.bf16.gmra.mxu0 %v934
        %v948 = vpop.f32.mrf.mxu0
        %v949 = vadd.f32 0.0, %v948
        %v950 = vpop.f32.mrf.mxu0
        %951 = vdwg.mxu0
        %v952 = vadd.f32 %v871, %v949
        %953 = vrot.lane.b32.xlu0 %v715, 104
        %v954 = vpop.permute.xlu0 %953
        %955 = vrot.lane.b32.xlu0 %v716, 72
        %v956 = vpop.permute.xlu0 %955
        %v958 = vsel %vm721, %v954, 0
        %v961 = vsel %vm721, %v956, 0
        %963 = vmatpush.bf16.xpose.msra.mxu0 0
        %964 = vmatpush.bf16.xpose.msra.mxu0 0
        %965 = vmatpush.bf16.xpose.msra.mxu0 0
        %966 = vmatpush.bf16.xpose.msra.mxu0 0
        %967 = vmatpush.bf16.xpose.msra.mxu0 0
        %968 = vmatpush.bf16.xpose.msra.mxu0 0
        %969 = vmatpush.bf16.xpose.msra.mxu0 0
        %970 = vmatpush.bf16.xpose.msra.mxu0 %v961
        %971 = vmatmul.bf16.gmra.mxu0 %v958
        %v972 = vpop.f32.mrf.mxu0
        %v973 = vadd.f32 0.0, %v972
        %v974 = vpop.f32.mrf.mxu0
        %975 = vdwg.mxu0
        %v976 = vsel %vm721, %v973, -inf
        %977 = vmax.xlane.f32.xlu0 %v976
        %v978 = vpop.xlane.xlu0 %977
        %v979 = vsub.f32 %v973, %v978
        %v980 = vmul.f32 %v979, 1.442695
        %v981 = vpow.pop %v980
        %v982 = vsel %vm721, %v981, 0.0
        %983 = vadd.xlane.f32.xlu0 %v982
        %v984 = vpop.xlane.xlu0 %983
        %v985 = vrcp.pop %v984
        %v986 = vmul.f32 %v981, %v985
        %v987 = vpack.c.bf16 %v986, %v986
        %988 = vrot.lane.b32.xlu0 %v717, 104
        %v989 = vpop.permute.xlu0 %988
        %v991 = vsel %vm721, %v987, 0
        %v994 = vsel %vm756, %v989, 0
        %996 = vmatpush.bf16.msra.mxu0 0
        %997 = vmatpush.bf16.msra.mxu0 0
        %998 = vmatpush.bf16.msra.mxu0 0
        %999 = vmatpush.bf16.msra.mxu0 0
        %1000 = vmatpush.bf16.msra.mxu0 0
        %1001 = vmatpush.bf16.msra.mxu0 0
        %1002 = vmatpush.bf16.msra.mxu0 0
        %1003 = vmatpush.bf16.msra.mxu0 %v994
        %1004 = vmatmul.bf16.gmra.mxu0 %v991
        %v1005 = vpop.f32.mrf.mxu0
        %v1006 = vadd.f32 0.0, %v1005
        %v1007 = vpop.f32.mrf.mxu0
        %1008 = vdwg.mxu0
        %v1009 = vpack.c.bf16 %v1006, %v1006
        %s1010 = scalar_lea.vmem [#allocation7], 12
        %v1011 = vld [vmem:[%s1010] sm:$0xf]
        %v1013 = vsel %vm721, %v1009, 0
        %v1016 = vsel %vm756, %v1011, 0
        %1018 = vmatpush.bf16.msra.mxu0 0
        %1019 = vmatpush.bf16.msra.mxu0 0
        %1020 = vmatpush.bf16.msra.mxu0 0
        %1021 = vmatpush.bf16.msra.mxu0 0
        %1022 = vmatpush.bf16.msra.mxu0 0
        %1023 = vmatpush.bf16.msra.mxu0 0
        %1024 = vmatpush.bf16.msra.mxu0 0
        %1025 = vmatpush.bf16.msra.mxu0 %v1016
        %1026 = vmatmul.bf16.gmra.mxu0 %v1013
        %v1027 = vpop.f32.mrf.mxu0
        %v1028 = vadd.f32 0.0, %v1027
        %v1029 = vpop.f32.mrf.mxu0
        %1030 = vdwg.mxu0
        %v1031 = vadd.f32 %v952, %v1028
        %v1032 = vadd.f32 %v646, %v1031
        %v1034 = vperm.slane %v639, 0
        %v1036 = vadd.f32 %v1032, %v1034
        %v1037 = vsel %vm665, %v1036, 0.0
        %v1038 = vrot.slane %v1037, 4
        %v1039 = vadd.f32 %v1037, %v1038
        %v1040 = vrot.slane %v1039, 2
        %v1041 = vadd.f32 %v1039, %v1040
        %v1042 = vrot.slane %v1041, 1
        %v1043 = vadd.f32 %v1041, %v1042
        %v1044 = vrcp.pop 8.0
        %v1045 = vmul.f32 8.0, %v1044
        %v1046 = vsub.f32 1.0, %v1045
        %v1047 = vmul.f32 %v1044, %v1046
        %v1048 = vadd.f32 %v1044, %v1047
        %vm1049 = vweird.f32 %v1044
        %v1050 = vsel %vm1049, %v1044, %v1048
        %v1051 = vmul.f32 %v1043, %v1050
        %v1052 = vsub.f32 %v1036, %v1051
        %v1053 = vmul.f32 %v1052, %v1052
        %v1054 = vsel %vm665, %v1053, 0.0
        %v1055 = vrot.slane %v1054, 4
        %v1056 = vadd.f32 %v1054, %v1055
        %v1057 = vrot.slane %v1056, 2
        %v1058 = vadd.f32 %v1056, %v1057
        %v1059 = vrot.slane %v1058, 1
        %v1060 = vadd.f32 %v1058, %v1059
        %v1061 = vmul.f32 %v1060, %v1050
        %v1062 = vadd.f32 %v1061, 1e-05
        %v1063 = vrsqrt.pop %v1062
        %v1064 = vmul.f32 %v1063, %v1062
        %v1065 = vmul.f32 %v1064, %v1063
        %v1066 = vmul.f32 0.5, %v1065
        %v1067 = vsub.f32 1.5, %v1066
        %v1068 = vmul.f32 %v1063, %v1067
        %vm1069 = vweird.f32 %v1062
        %vm1070 = vweird.f32 %v1063
        %vm1071 = vmor %vm1069, %vm1070
        %v1072 = vsel %vm1071, %v1063, %v1068
        %v1073 = vmul.f32 %v1052, %v1072
        %v1075 = vperm.slane %v642, 0
        %v1077 = vmul.f32 %v1073, %v1075
        %v1079 = vperm.slane %v643, 0
        %v1081 = vadd.f32 %v1077, %v1079
        %v1082 = vpack.c.bf16 %v1081, %v1081
        %v1084 = vperm.slane %v640, 0
        %v1090 = vunpack.c.l.b16 %v625
        %v1091 = vunpack.c.l.b16 %v626
        %v1092 = vunpack.c.l.b16 %v627
        %v1093 = vunpack.c.l.b16 %v628
        %v1094 = vpack.c.b16 %v1091, %v1090
        %v1095 = vpack.c.b16 %v1093, %v1092
        %v1099 = vsel %vm665, %v1082, 0
        %1101 = vmatpush.bf16.msra.mxu0 0
        %1102 = vmatpush.bf16.msra.mxu0 0
        %1103 = vmatpush.bf16.msra.mxu0 0
        %1104 = vmatpush.bf16.msra.mxu0 0
        %1105 = vmatpush.bf16.msra.mxu0 0
        %1106 = vmatpush.bf16.msra.mxu0 0
        %1107 = vmatpush.bf16.msra.mxu0 %v1095
        %1108 = vmatpush.bf16.msra.mxu0 %v1094
        %1109 = vmatmul.bf16.gmra.mxu0 %v1099
        %v1110 = vpop.f32.mrf.mxu0
        %v1111 = vadd.f32 %v1084, %v1110
        %v1112 = vpop.f32.mrf.mxu0
        %1113 = vdwg.mxu0
        %vm1114 = vcmp.gt.f32.partialorder %v1111, 0.0
        %v1115 = vmul.f32 %v1111, 0.01
        %v1116 = vsel %vm1114, %v1111, %v1115
        %v1117 = vpack.c.bf16 %v1116, %v1116
        %v1126 = vunpack.c.l.b16 %v629
        %v1127 = vunpack.c.l.b16 %v630
        %v1128 = vunpack.c.l.b16 %v631
        %v1129 = vunpack.c.l.b16 %v632
        %v1130 = vunpack.c.l.b16 %v633
        %v1131 = vunpack.c.l.b16 %v634
        %v1132 = vunpack.c.l.b16 %v635
        %v1133 = vunpack.c.l.b16 %v636
        %v1134 = vpack.c.b16 %v1127, %v1126
        %v1135 = vpack.c.b16 %v1129, %v1128
        %v1136 = vpack.c.b16 %v1131, %v1130
        %v1137 = vpack.c.b16 %v1133, %v1132
        %vm1142 = vcmask 523264
        %v1144 = vsel %vm1142, %v1117, 0
        %1146 = vmatpush.bf16.msra.mxu0 0
        %1147 = vmatpush.bf16.msra.mxu0 0
        %1148 = vmatpush.bf16.msra.mxu0 0
        %1149 = vmatpush.bf16.msra.mxu0 0
        %1150 = vmatpush.bf16.msra.mxu0 %v1137
        %1151 = vmatpush.bf16.msra.mxu0 %v1136
        %1152 = vmatpush.bf16.msra.mxu0 %v1135
        %1153 = vmatpush.bf16.msra.mxu0 %v1134
        %1154 = vmatmul.bf16.gmra.mxu0 %v1144
        %v1155 = vpop.f32.mrf.mxu0
        %v1156 = vadd.f32 0.0, %v1155
        %v1157 = vpop.f32.mrf.mxu0
        %1158 = vdwg.mxu0
        %v1159 = vadd.f32 %v1081, %v1156
        %v1161 = vperm.slane %v641, 0
        %v1163 = vadd.f32 %v1159, %v1161
        %v1164 = vsel %vm665, %v1163, 0.0
        %v1165 = vrot.slane %v1164, 4
        %v1166 = vadd.f32 %v1164, %v1165
        %v1167 = vrot.slane %v1166, 2
        %v1168 = vadd.f32 %v1166, %v1167
        %v1169 = vrot.slane %v1168, 1
        %v1170 = vadd.f32 %v1168, %v1169
        %v1171 = vmul.f32 %v1170, %v1050
        %v1172 = vsub.f32 %v1163, %v1171
        %v1173 = vmul.f32 %v1172, %v1172
        %v1174 = vsel %vm665, %v1173, 0.0
        %v1175 = vrot.slane %v1174, 4
        %v1176 = vadd.f32 %v1174, %v1175
        %v1177 = vrot.slane %v1176, 2
        %v1178 = vadd.f32 %v1176, %v1177
        %v1179 = vrot.slane %v1178, 1
        %v1180 = vadd.f32 %v1178, %v1179
        %v1181 = vmul.f32 %v1180, %v1050
        %v1182 = vadd.f32 %v1181, 1e-05
        %v1183 = vrsqrt.pop %v1182
        %v1184 = vmul.f32 %v1183, %v1182
        %v1185 = vmul.f32 %v1184, %v1183
        %v1186 = vmul.f32 0.5, %v1185
        %v1187 = vsub.f32 1.5, %v1186
        %v1188 = vmul.f32 %v1183, %v1187
        %vm1189 = vweird.f32 %v1182
        %vm1190 = vweird.f32 %v1183
        %vm1191 = vmor %vm1189, %vm1190
        %v1192 = vsel %vm1191, %v1183, %v1188
        %v1193 = vmul.f32 %v1172, %v1192
        %v1195 = vperm.slane %v644, 0
        %v1197 = vmul.f32 %v1193, %v1195
        %v1199 = vperm.slane %v645, 0
        %v1201 = vadd.f32 %v1197, %v1199
        %1202 = vst.msk [vmem:[%s607] sm:$0xff] %vm665, %v1201
        %s1203 = scalar_lea.vmem %s612, 8
        %v1204 = vld [vmem:[%s1203] sm:$0xff]
        %s1205 = scalar_lea.vmem %s538, 8 [#allocation2]
        %v1206 = vld [vmem:[%s1205] sm:$0xff]
        %v1207 = vadd.f32 %v1204, %v1206
        %v1208 = vpack.c.bf16 %v1207, %v1207
        %v1210 = vsel %vm665, %v1208, 0
        %1212 = vmatpush.bf16.msra.mxu0 0
        %1213 = vmatpush.bf16.msra.mxu0 0
        %1214 = vmatpush.bf16.msra.mxu0 0
        %1215 = vmatpush.bf16.msra.mxu0 0
        %1216 = vmatpush.bf16.msra.mxu0 0
        %1217 = vmatpush.bf16.msra.mxu0 0
        %1218 = vmatpush.bf16.msra.mxu0 %v662
        %1219 = vmatpush.bf16.msra.mxu0 %v661
        %1220 = vmatmul.bf16.gmra.mxu0 %v1210
        %v1221 = vpop.f32.mrf.mxu0
        %v1222 = vadd.f32 %v651, %v1221
        %v1223 = vpop.f32.mrf.mxu0
        %1224 = vdwg.mxu0
        %v1225 = vpack.c.bf16 %v1204, %v1204
        %v1227 = vsel %vm665, %v1225, 0
        %1229 = vmatpush.bf16.msra.mxu0 0
        %1230 = vmatpush.bf16.msra.mxu0 0
        %1231 = vmatpush.bf16.msra.mxu0 0
        %1232 = vmatpush.bf16.msra.mxu0 0
        %1233 = vmatpush.bf16.msra.mxu0 0
        %1234 = vmatpush.bf16.msra.mxu0 0
        %1235 = vmatpush.bf16.msra.mxu0 %v695
        %1236 = vmatpush.bf16.msra.mxu0 %v694
        %1237 = vmatmul.bf16.gmra.mxu0 %v1227
        %v1238 = vpop.f32.mrf.mxu0
        %v1239 = vadd.f32 %v684, %v1238
        %v1240 = vpop.f32.mrf.mxu0
        %1241 = vdwg.mxu0
        %v1242 = vmul.f32 %v1222, 0.35355338
        %v1243 = vpack.c.bf16 %v1242, %v1242
        %v1244 = vpack.c.bf16 %v1222, %v1222
        %v1245 = vpack.c.bf16 %v1239, %v1239
        %1247 = vrot.lane.b32.xlu0 %v1244, 96
        %v1248 = vpop.permute.xlu0 %1247
        %v1250 = vsel %vm721, %v1243, 0
        %v1253 = vsel %vm721, %v1248, 0
        %1255 = vmatpush.bf16.xpose.msra.mxu0 0
        %1256 = vmatpush.bf16.xpose.msra.mxu0 0
        %1257 = vmatpush.bf16.xpose.msra.mxu0 0
        %1258 = vmatpush.bf16.xpose.msra.mxu0 0
        %1259 = vmatpush.bf16.xpose.msra.mxu0 0
        %1260 = vmatpush.bf16.xpose.msra.mxu0 0
        %1261 = vmatpush.bf16.xpose.msra.mxu0 0
        %1262 = vmatpush.bf16.xpose.msra.mxu0 %v1253
        %1263 = vmatmul.bf16.gmra.mxu0 %v1250
        %v1264 = vpop.f32.mrf.mxu0
        %v1265 = vadd.f32 0.0, %v1264
        %v1266 = vpop.f32.mrf.mxu0
        %1267 = vdwg.mxu0
        %v1268 = vsel %vm721, %v1265, -inf
        %1269 = vmax.xlane.f32.xlu0 %v1268
        %v1270 = vpop.xlane.xlu0 %1269
        %v1271 = vsub.f32 %v1265, %v1270
        %v1272 = vmul.f32 %v1271, 1.442695
        %v1273 = vpow.pop %v1272
        %v1274 = vsel %vm721, %v1273, 0.0
        %1275 = vadd.xlane.f32.xlu0 %v1274
        %v1276 = vpop.xlane.xlu0 %1275
        %v1277 = vrcp.pop %v1276
        %v1278 = vmul.f32 %v1273, %v1277
        %v1279 = vpack.c.bf16 %v1278, %v1278
        %v1281 = vsel %vm721, %v1279, 0
        %v1284 = vsel %vm756, %v1245, 0
        %1286 = vmatpush.bf16.msra.mxu0 0
        %1287 = vmatpush.bf16.msra.mxu0 0
        %1288 = vmatpush.bf16.msra.mxu0 0
        %1289 = vmatpush.bf16.msra.mxu0 0
        %1290 = vmatpush.bf16.msra.mxu0 0
        %1291 = vmatpush.bf16.msra.mxu0 0
        %1292 = vmatpush.bf16.msra.mxu0 0
        %1293 = vmatpush.bf16.msra.mxu0 %v1284
        %1294 = vmatmul.bf16.gmra.mxu0 %v1281
        %v1295 = vpop.f32.mrf.mxu0
        %v1296 = vadd.f32 0.0, %v1295
        %v1297 = vpop.f32.mrf.mxu0
        %1298 = vdwg.mxu0
        %v1299 = vpack.c.bf16 %v1296, %v1296
        %v1300 = vld [vmem:[#allocation7] sm:$0xf]
        %1302 = vrot.lane.b32.xlu0 %v1243, 120
        %v1303 = vpop.permute.xlu0 %1302
        %1304 = vrot.lane.b32.xlu0 %v1244, 88
        %v1305 = vpop.permute.xlu0 %1304
        %v1307 = vsel %vm721, %v1303, 0
        %v1310 = vsel %vm721, %v1305, 0
        %1312 = vmatpush.bf16.xpose.msra.mxu0 0
        %1313 = vmatpush.bf16.xpose.msra.mxu0 0
        %1314 = vmatpush.bf16.xpose.msra.mxu0 0
        %1315 = vmatpush.bf16.xpose.msra.mxu0 0
        %1316 = vmatpush.bf16.xpose.msra.mxu0 0
        %1317 = vmatpush.bf16.xpose.msra.mxu0 0
        %1318 = vmatpush.bf16.xpose.msra.mxu0 0
        %1319 = vmatpush.bf16.xpose.msra.mxu0 %v1310
        %1320 = vmatmul.bf16.gmra.mxu0 %v1307
        %v1321 = vpop.f32.mrf.mxu0
        %v1322 = vadd.f32 0.0, %v1321
        %v1323 = vpop.f32.mrf.mxu0
        %1324 = vdwg.mxu0
        %v1325 = vsel %vm721, %v1322, -inf
        %1326 = vmax.xlane.f32.xlu0 %v1325
        %v1327 = vpop.xlane.xlu0 %1326
        %v1328 = vsub.f32 %v1322, %v1327
        %v1329 = vmul.f32 %v1328, 1.442695
        %v1330 = vpow.pop %v1329
        %v1331 = vsel %vm721, %v1330, 0.0
        %1332 = vadd.xlane.f32.xlu0 %v1331
        %v1333 = vpop.xlane.xlu0 %1332
        %v1334 = vrcp.pop %v1333
        %v1335 = vmul.f32 %v1330, %v1334
        %v1336 = vpack.c.bf16 %v1335, %v1335
        %1338 = vrot.lane.b32.xlu0 %v1245, 120
        %v1339 = vpop.permute.xlu0 %1338
        %v1341 = vsel %vm721, %v1336, 0
        %v1344 = vsel %vm756, %v1339, 0
        %1346 = vmatpush.bf16.msra.mxu0 0
        %1347 = vmatpush.bf16.msra.mxu0 0
        %1348 = vmatpush.bf16.msra.mxu0 0
        %1349 = vmatpush.bf16.msra.mxu0 0
        %1350 = vmatpush.bf16.msra.mxu0 0
        %1351 = vmatpush.bf16.msra.mxu0 0
        %1352 = vmatpush.bf16.msra.mxu0 0
        %1353 = vmatpush.bf16.msra.mxu0 %v1344
        %1354 = vmatmul.bf16.gmra.mxu0 %v1341
        %v1355 = vpop.f32.mrf.mxu0
        %v1356 = vadd.f32 0.0, %v1355
        %v1357 = vpop.f32.mrf.mxu0
        %1358 = vdwg.mxu0
        %v1359 = vpack.c.bf16 %v1356, %v1356
        %v1360 = vld [vmem:[%s834] sm:$0xf]
        %v1362 = vsel %vm721, %v1359, 0
        %v1365 = vsel %vm756, %v1360, 0
        %1367 = vmatpush.bf16.msra.mxu0 0
        %1368 = vmatpush.bf16.msra.mxu0 0
        %1369 = vmatpush.bf16.msra.mxu0 0
        %1370 = vmatpush.bf16.msra.mxu0 0
        %1371 = vmatpush.bf16.msra.mxu0 0
        %1372 = vmatpush.bf16.msra.mxu0 0
        %1373 = vmatpush.bf16.msra.mxu0 0
        %1374 = vmatpush.bf16.msra.mxu0 %v1365
        %1375 = vmatmul.bf16.gmra.mxu0 %v1362
        %v1376 = vpop.f32.mrf.mxu0
        %v1377 = vadd.f32 0.0, %v1376
        %v1378 = vpop.f32.mrf.mxu0
        %1379 = vdwg.mxu0
        %v1381 = vsel %vm721, %v1299, 0
        %v1384 = vsel %vm756, %v1300, 0
        %1386 = vmatpush.bf16.msra.mxu0 0
        %1387 = vmatpush.bf16.msra.mxu0 0
        %1388 = vmatpush.bf16.msra.mxu0 0
        %1389 = vmatpush.bf16.msra.mxu0 0
        %1390 = vmatpush.bf16.msra.mxu0 0
        %1391 = vmatpush.bf16.msra.mxu0 0
        %1392 = vmatpush.bf16.msra.mxu0 0
        %1393 = vmatpush.bf16.msra.mxu0 %v1384
        %1394 = vmatmul.bf16.gmra.mxu0 %v1381
        %v1395 = vpop.f32.mrf.mxu0
        %v1396 = vadd.f32 %v1377, %v1395
        %v1397 = vpop.f32.mrf.mxu0
        %1398 = vdwg.mxu0
        %1399 = vrot.lane.b32.xlu0 %v1243, 112
        %v1400 = vpop.permute.xlu0 %1399
        %1401 = vrot.lane.b32.xlu0 %v1244, 80
        %v1402 = vpop.permute.xlu0 %1401
        %v1404 = vsel %vm721, %v1400, 0
        %v1407 = vsel %vm721, %v1402, 0
        %1409 = vmatpush.bf16.xpose.msra.mxu0 0
        %1410 = vmatpush.bf16.xpose.msra.mxu0 0
        %1411 = vmatpush.bf16.xpose.msra.mxu0 0
        %1412 = vmatpush.bf16.xpose.msra.mxu0 0
        %1413 = vmatpush.bf16.xpose.msra.mxu0 0
        %1414 = vmatpush.bf16.xpose.msra.mxu0 0
        %1415 = vmatpush.bf16.xpose.msra.mxu0 0
        %1416 = vmatpush.bf16.xpose.msra.mxu0 %v1407
        %1417 = vmatmul.bf16.gmra.mxu0 %v1404
        %v1418 = vpop.f32.mrf.mxu0
        %v1419 = vadd.f32 0.0, %v1418
        %v1420 = vpop.f32.mrf.mxu0
        %1421 = vdwg.mxu0
        %v1422 = vsel %vm721, %v1419, -inf
        %1423 = vmax.xlane.f32.xlu0 %v1422
        %v1424 = vpop.xlane.xlu0 %1423
        %v1425 = vsub.f32 %v1419, %v1424
        %v1426 = vmul.f32 %v1425, 1.442695
        %v1427 = vpow.pop %v1426
        %v1428 = vsel %vm721, %v1427, 0.0
        %1429 = vadd.xlane.f32.xlu0 %v1428
        %v1430 = vpop.xlane.xlu0 %1429
        %v1431 = vrcp.pop %v1430
        %v1432 = vmul.f32 %v1427, %v1431
        %v1433 = vpack.c.bf16 %v1432, %v1432
        %1434 = vrot.lane.b32.xlu0 %v1245, 112
        %v1435 = vpop.permute.xlu0 %1434
        %v1437 = vsel %vm721, %v1433, 0
        %v1440 = vsel %vm756, %v1435, 0
        %1442 = vmatpush.bf16.msra.mxu0 0
        %1443 = vmatpush.bf16.msra.mxu0 0
        %1444 = vmatpush.bf16.msra.mxu0 0
        %1445 = vmatpush.bf16.msra.mxu0 0
        %1446 = vmatpush.bf16.msra.mxu0 0
        %1447 = vmatpush.bf16.msra.mxu0 0
        %1448 = vmatpush.bf16.msra.mxu0 0
        %1449 = vmatpush.bf16.msra.mxu0 %v1440
        %1450 = vmatmul.bf16.gmra.mxu0 %v1437
        %v1451 = vpop.f32.mrf.mxu0
        %v1452 = vadd.f32 0.0, %v1451
        %v1453 = vpop.f32.mrf.mxu0
        %1454 = vdwg.mxu0
        %v1455 = vpack.c.bf16 %v1452, %v1452
        %v1456 = vld [vmem:[%s931] sm:$0xf]
        %v1458 = vsel %vm721, %v1455, 0
        %v1461 = vsel %vm756, %v1456, 0
        %1463 = vmatpush.bf16.msra.mxu0 0
        %1464 = vmatpush.bf16.msra.mxu0 0
        %1465 = vmatpush.bf16.msra.mxu0 0
        %1466 = vmatpush.bf16.msra.mxu0 0
        %1467 = vmatpush.bf16.msra.mxu0 0
        %1468 = vmatpush.bf16.msra.mxu0 0
        %1469 = vmatpush.bf16.msra.mxu0 0
        %1470 = vmatpush.bf16.msra.mxu0 %v1461
        %1471 = vmatmul.bf16.gmra.mxu0 %v1458
        %v1472 = vpop.f32.mrf.mxu0
        %v1473 = vadd.f32 0.0, %v1472
        %v1474 = vpop.f32.mrf.mxu0
        %1475 = vdwg.mxu0
        %v1476 = vadd.f32 %v1396, %v1473
        %1477 = vrot.lane.b32.xlu0 %v1243, 104
        %v1478 = vpop.permute.xlu0 %1477
        %1479 = vrot.lane.b32.xlu0 %v1244, 72
        %v1480 = vpop.permute.xlu0 %1479
        %v1482 = vsel %vm721, %v1478, 0
        %v1485 = vsel %vm721, %v1480, 0
        %1487 = vmatpush.bf16.xpose.msra.mxu0 0
        %1488 = vmatpush.bf16.xpose.msra.mxu0 0
        %1489 = vmatpush.bf16.xpose.msra.mxu0 0
        %1490 = vmatpush.bf16.xpose.msra.mxu0 0
        %1491 = vmatpush.bf16.xpose.msra.mxu0 0
        %1492 = vmatpush.bf16.xpose.msra.mxu0 0
        %1493 = vmatpush.bf16.xpose.msra.mxu0 0
        %1494 = vmatpush.bf16.xpose.msra.mxu0 %v1485
        %1495 = vmatmul.bf16.gmra.mxu0 %v1482
        %v1496 = vpop.f32.mrf.mxu0
        %v1497 = vadd.f32 0.0, %v1496
        %v1498 = vpop.f32.mrf.mxu0
        %1499 = vdwg.mxu0
        %v1500 = vsel %vm721, %v1497, -inf
        %1501 = vmax.xlane.f32.xlu0 %v1500
        %v1502 = vpop.xlane.xlu0 %1501
        %v1503 = vsub.f32 %v1497, %v1502
        %v1504 = vmul.f32 %v1503, 1.442695
        %v1505 = vpow.pop %v1504
        %v1506 = vsel %vm721, %v1505, 0.0
        %1507 = vadd.xlane.f32.xlu0 %v1506
        %v1508 = vpop.xlane.xlu0 %1507
        %v1509 = vrcp.pop %v1508
        %v1510 = vmul.f32 %v1505, %v1509
        %v1511 = vpack.c.bf16 %v1510, %v1510
        %1512 = vrot.lane.b32.xlu0 %v1245, 104
        %v1513 = vpop.permute.xlu0 %1512
        %v1515 = vsel %vm721, %v1511, 0
        %v1518 = vsel %vm756, %v1513, 0
        %1520 = vmatpush.bf16.msra.mxu0 0
        %1521 = vmatpush.bf16.msra.mxu0 0
        %1522 = vmatpush.bf16.msra.mxu0 0
        %1523 = vmatpush.bf16.msra.mxu0 0
        %1524 = vmatpush.bf16.msra.mxu0 0
        %1525 = vmatpush.bf16.msra.mxu0 0
        %1526 = vmatpush.bf16.msra.mxu0 0
        %1527 = vmatpush.bf16.msra.mxu0 %v1518
        %1528 = vmatmul.bf16.gmra.mxu0 %v1515
        %v1529 = vpop.f32.mrf.mxu0
        %v1530 = vadd.f32 0.0, %v1529
        %v1531 = vpop.f32.mrf.mxu0
        %1532 = vdwg.mxu0
        %v1533 = vpack.c.bf16 %v1530, %v1530
        %v1534 = vld [vmem:[%s1010] sm:$0xf]
        %v1536 = vsel %vm721, %v1533, 0
        %v1539 = vsel %vm756, %v1534, 0
        %1541 = vmatpush.bf16.msra.mxu0 0
        %1542 = vmatpush.bf16.msra.mxu0 0
        %1543 = vmatpush.bf16.msra.mxu0 0
        %1544 = vmatpush.bf16.msra.mxu0 0
        %1545 = vmatpush.bf16.msra.mxu0 0
        %1546 = vmatpush.bf16.msra.mxu0 0
        %1547 = vmatpush.bf16.msra.mxu0 0
        %1548 = vmatpush.bf16.msra.mxu0 %v1539
        %1549 = vmatmul.bf16.gmra.mxu0 %v1536
        %v1550 = vpop.f32.mrf.mxu0
        %v1551 = vadd.f32 0.0, %v1550
        %v1552 = vpop.f32.mrf.mxu0
        %1553 = vdwg.mxu0
        %v1554 = vadd.f32 %v1476, %v1551
        %v1555 = vadd.f32 %v1204, %v1554
        %v1556 = vadd.f32 %v1555, %v1034
        %v1557 = vsel %vm665, %v1556, 0.0
        %v1558 = vrot.slane %v1557, 4
        %v1559 = vadd.f32 %v1557, %v1558
        %v1560 = vrot.slane %v1559, 2
        %v1561 = vadd.f32 %v1559, %v1560
        %v1562 = vrot.slane %v1561, 1
        %v1563 = vadd.f32 %v1561, %v1562
        %v1564 = vmul.f32 %v1563, %v1050
        %v1565 = vsub.f32 %v1556, %v1564
        %v1566 = vmul.f32 %v1565, %v1565
        %v1567 = vsel %vm665, %v1566, 0.0
        %v1568 = vrot.slane %v1567, 4
        %v1569 = vadd.f32 %v1567, %v1568
        %v1570 = vrot.slane %v1569, 2
        %v1571 = vadd.f32 %v1569, %v1570
        %v1572 = vrot.slane %v1571, 1
        %v1573 = vadd.f32 %v1571, %v1572
        %v1574 = vmul.f32 %v1573, %v1050
        %v1575 = vadd.f32 %v1574, 1e-05
        %v1576 = vrsqrt.pop %v1575
        %v1577 = vmul.f32 %v1576, %v1575
        %v1578 = vmul.f32 %v1577, %v1576
        %v1579 = vmul.f32 0.5, %v1578
        %v1580 = vsub.f32 1.5, %v1579
        %v1581 = vmul.f32 %v1576, %v1580
        %vm1582 = vweird.f32 %v1575
        %vm1583 = vweird.f32 %v1576
        %vm1584 = vmor %vm1582, %vm1583
        %v1585 = vsel %vm1584, %v1576, %v1581
        %v1586 = vmul.f32 %v1565, %v1585
        %v1587 = vmul.f32 %v1586, %v1075
        %v1588 = vadd.f32 %v1587, %v1079
        %v1589 = vpack.c.bf16 %v1588, %v1588
        %v1591 = vsel %vm665, %v1589, 0
        %1593 = vmatpush.bf16.msra.mxu0 0
        %1594 = vmatpush.bf16.msra.mxu0 0
        %1595 = vmatpush.bf16.msra.mxu0 0
        %1596 = vmatpush.bf16.msra.mxu0 0
        %1597 = vmatpush.bf16.msra.mxu0 0
        %1598 = vmatpush.bf16.msra.mxu0 0
        %1599 = vmatpush.bf16.msra.mxu0 %v1095
        %1600 = vmatpush.bf16.msra.mxu0 %v1094
        %1601 = vmatmul.bf16.gmra.mxu0 %v1591
        %v1602 = vpop.f32.mrf.mxu0
        %v1603 = vadd.f32 %v1084, %v1602
        %v1604 = vpop.f32.mrf.mxu0
        %1605 = vdwg.mxu0
        %vm1606 = vcmp.gt.f32.partialorder %v1603, 0.0
        %v1607 = vmul.f32 %v1603, 0.01
        %v1608 = vsel %vm1606, %v1603, %v1607
        %v1609 = vpack.c.bf16 %v1608, %v1608
        %v1611 = vsel %vm1142, %v1609, 0
        %1613 = vmatpush.bf16.msra.mxu0 0
        %1614 = vmatpush.bf16.msra.mxu0 0
        %1615 = vmatpush.bf16.msra.mxu0 0
        %1616 = vmatpush.bf16.msra.mxu0 0
        %1617 = vmatpush.bf16.msra.mxu0 %v1137
        %1618 = vmatpush.bf16.msra.mxu0 %v1136
        %1619 = vmatpush.bf16.msra.mxu0 %v1135
        %1620 = vmatpush.bf16.msra.mxu0 %v1134
        %1621 = vmatmul.bf16.gmra.mxu0 %v1611
        %v1622 = vpop.f32.mrf.mxu0
        %v1623 = vadd.f32 0.0, %v1622
        %v1624 = vpop.f32.mrf.mxu0
        %1625 = vdwg.mxu0
        %v1626 = vadd.f32 %v1588, %v1623
        %v1627 = vadd.f32 %v1626, %v1161
        %v1628 = vsel %vm665, %v1627, 0.0
        %v1629 = vrot.slane %v1628, 4
        %v1630 = vadd.f32 %v1628, %v1629
        %v1631 = vrot.slane %v1630, 2
        %v1632 = vadd.f32 %v1630, %v1631
        %v1633 = vrot.slane %v1632, 1
        %v1634 = vadd.f32 %v1632, %v1633
        %v1635 = vmul.f32 %v1634, %v1050
        %v1636 = vsub.f32 %v1627, %v1635
        %v1637 = vmul.f32 %v1636, %v1636
        %v1638 = vsel %vm665, %v1637, 0.0
        %v1639 = vrot.slane %v1638, 4
        %v1640 = vadd.f32 %v1638, %v1639
        %v1641 = vrot.slane %v1640, 2
        %v1642 = vadd.f32 %v1640, %v1641
        %v1643 = vrot.slane %v1642, 1
        %v1644 = vadd.f32 %v1642, %v1643
        %v1645 = vmul.f32 %v1644, %v1050
        %v1646 = vadd.f32 %v1645, 1e-05
        %v1647 = vrsqrt.pop %v1646
        %v1648 = vmul.f32 %v1647, %v1646
        %v1649 = vmul.f32 %v1648, %v1647
        %v1650 = vmul.f32 0.5, %v1649
        %v1651 = vsub.f32 1.5, %v1650
        %v1652 = vmul.f32 %v1647, %v1651
        %vm1653 = vweird.f32 %v1646
        %vm1654 = vweird.f32 %v1647
        %vm1655 = vmor %vm1653, %vm1654
        %v1656 = vsel %vm1655, %v1647, %v1652
        %v1657 = vmul.f32 %v1636, %v1656
        %v1658 = vmul.f32 %v1657, %v1195
        %v1659 = vadd.f32 %v1658, %v1199
        %s1660 = scalar_lea.vmem %s607, 8 [#allocation10]
        %1661 = vst.msk [vmem:[%s1660] sm:$0xff] %vm665, %v1659
        %s1662 = sand.u32 %s389, 1
        %s1663 = scalar_lea.sflag [#allocation4], %s1662
        %s1664 = sand.u32 %s389, 1
        %s1665 = smul.addr %s1664, 16
        %s1666 = scalar_lea.vmem [#allocation10], %s1665
        // Predicated region
        $region101: #{tpu_custom_call.1} parent=83 // pred_check
          %p1667 = pneg %p399
        $region102: #{tpu_custom_call.1} parent=83 // pred_check_branch
          %1669 = sbr.rel (%p1667) target = $region104
        $region103: #{tpu_custom_call.1} parent=83 // pred_region
          %s1670 = smul.u32 2, %s35
          %1672 = vsyncadd %s1663, 0
          %s1673 = smul.addr %s1670, 8
          %s1674 = scalar_lea.hbm %s16, %s1673
          %s1675 = sshll.u32 %s1666, 4
          %s1676 = int_to_ptr.vmem [resolvable:$true] %s1675
          %s1677 = sshll.u32 %s1674, 4
          %s1678 = int_to_ptr.hbm [resolvable:$true] %s1677
          %1683 = dma.vmem_to_hbm [thread:$0]  %s1676, 256, %s1678, %s1663, 128, 128, 8
        $region104: #{tpu_custom_call.1} parent=83 // pred_fallthru
          _
      $region84: #{tpu_custom_call.1} parent=5 // pred_fallthru
        _
      %p1684 = scmp.le.s32.totalorder 2, %s30
      // Predicated region
      $region105: #{tpu_custom_call.1} parent=5 // pred_check
        %p1685 = pneg %p1684
      $region106: #{tpu_custom_call.1} parent=5 // pred_check_branch
        %1687 = sbr.rel (%p1685) target = $region108
      $region107: #{tpu_custom_call.1} parent=5 // pred_region
        %s1688 = ssub.s32 %s30, 2
        // Predicated region
        $region109: #{tpu_custom_call.1} parent=107 // pred_check
          %p1689 = pneg %p405
        $region110: #{tpu_custom_call.1} parent=107 // pred_check_branch
          %1691 = sbr.rel (%p1689) target = $region112
        $region111: #{tpu_custom_call.1} parent=107 // pred_region
          %s1692 = sand.u32 %s390, 1
          %s1693 = scalar_lea.sflag [#allocation4], %s1692
          %s1694 = sand.u32 %s390, 1
          %s1695 = smul.addr %s1694, 16
          %s1696 = scalar_lea.vmem [#allocation10], %s1695
          %1698 = dma.done %s1693, 256
        $region112: #{tpu_custom_call.1} parent=107 // pred_fallthru
          _
      $region108: #{tpu_custom_call.1} parent=5 // pred_fallthru
        _
    $region6: #{tpu_custom_call.1} parent=1 // loop_footer
      %s34 = sadd.s32 1, %s30
    $region7: #{tpu_custom_call.1} parent=1 // loop_footer_branch
      %29 = sbr.rel target = $region3
    $region8: #{tpu_custom_call.1} parent=1 // loop_exit
      _
    %1699 = vsyncpa [#allocation3], 1
    %s1700 = scalar_lea.sflag [#allocation3], 1
    %1701 = vsyncpa %s1700, 1
    %1702 = vsyncpa [#allocation6], 1
    %1703 = vsyncpa [#allocation9], 1
    %1704 = vsyncpa [#allocation4], 1
    %s1705 = scalar_lea.sflag [#allocation4], 1
    %1706 = vsyncpa %s1705, 1

</llo_original>
